<compile_context>
chip_gen: v7x
topology: tpu7x:2x2x1
jax: 0.10.0
libtpu: 0.0.40
codegen_flags: <defaults>
</compile_context>

<pallas_src>
import functools
from math import floor

import jax
import jax.numpy as jnp
from jax.experimental import pallas as pl
from jax.experimental.pallas import tpu as pltpu


def _round_up(x, m):
    return (x + m - 1) // m * m


_VMEM_LIMIT = 48 * 1024 * 1024


# ---------------------------------------------------------------------------
# Kernel 1: conv1 as one full-K matmul  (im2col patches) @ (BN-scaled W) + b,
#           tanh, then zero the rows beyond the true sequence length so the
#           padded h1 buffer can feed kernel 2 directly.
# ---------------------------------------------------------------------------
def _conv1_kernel(p_ref, w_ref, b_ref, o_ref, *, valid_rows, apply_tanh):
    tl = o_ref.shape[1]
    acc = jnp.dot(p_ref[0], w_ref[...], preferred_element_type=jnp.float32)
    out = acc + b_ref[...]                               # folded BN shift
    if apply_tanh:
        out = jnp.tanh(out)
    row = (pl.program_id(1) * tl
           + jax.lax.broadcasted_iota(jnp.int32, (tl, 1), 0))
    out = jnp.where(row < valid_rows, out, 0.0)          # keep pad rows exactly 0
    o_ref[0] = out.astype(o_ref.dtype)


# ---------------------------------------------------------------------------
# Kernel 2: conv2 via in-kernel shifted-window taps (no im2col), shortcut 1x1
#           conv folded into the same contraction, merged BN bias, final tanh.
# ---------------------------------------------------------------------------
def _conv2_tap_kernel(*refs, ksize, use_shortcut, apply_tanh):
    if use_shortcut:
        hc_ref, hn_ref, w_ref, b_ref, xs_ref, wsc_ref, o_ref = refs
    else:
        hc_ref, hn_ref, w_ref, b_ref, o_ref = refs
        xs_ref = wsc_ref = None

    tl = o_ref.shape[1]
    tn = o_ref.shape[2]

    # Two adjacent, block-aligned h1 tiles cover every kernel window of this
    # output tile.  Shifted windows are sliced in f32 (avoids sublane-offset
    # slices of packed bf16) and cast back to bf16 for the MXU.
    # TODO(synk): slice the bf16 value directly once packed-offset relayouts
    #             are guaranteed; saves the per-tap casts.
    h2 = jnp.concatenate([hc_ref[0], hn_ref[0]], axis=0).astype(jnp.float32)

    acc = jnp.zeros((tl, tn), jnp.float32)
    for t in range(ksize):                               # static unroll over taps
        win = h2[t:t + tl].astype(jnp.bfloat16)
        acc = acc + jnp.dot(win, w_ref[t], preferred_element_type=jnp.float32)
    if use_shortcut:
        acc = acc + jnp.dot(xs_ref[0], wsc_ref[...],
                            preferred_element_type=jnp.float32)
    out = acc + b_ref[...]                               # merged BN shifts
    if apply_tanh:
        out = jnp.tanh(out)
    o_ref[0] = out.astype(o_ref.dtype)


# ---------------------------------------------------------------------------
# Glue: channels-last im2col (conv1 only), BN folding, full forward
# ---------------------------------------------------------------------------
def _im2col_nlc(x_nlc, ksize, stride, pad):
    """x: (N, L, C) -> patches (N, L_out, K*C), tap-major / channel-minor."""
    N, L, C = x_nlc.shape
    xp = jnp.pad(x_nlc, ((0, 0), (pad, pad), (0, 0)))
    L_out = (L + 2 * pad - ksize) // stride + 1
    idx = jnp.arange(L_out)[:, None] * stride + jnp.arange(ksize)[None, :]
    patches = xp[:, idx, :]                              # (N, L_out, K, C)
    return patches.reshape(N, L_out, ksize * C), L_out


def _w_to_2d(w):
    """PyTorch Conv1d weight (Cout, Cin, K) -> (K*Cin, Cout), tap-major."""
    Cout, Cin, K = w.shape
    return jnp.transpose(w, (2, 1, 0)).reshape(K * Cin, Cout)


def _bn_fold(bn, eps=1e-5):
    scale = bn["gamma"] / jnp.sqrt(bn["var"] + eps)
    shift = bn["beta"] - bn["mean"] * scale
    return scale, shift


def residual_block_forward(x, params, kernel_size, stride, use_res):
    """x: (N, C_in, L) NCW; returns (N, C_out, L_out) NCW (eval-mode)."""
    pad = int(floor(kernel_size / 2))
    N, Cin, L = x.shape
    Cout = params["w1"].shape[0]
    L1 = (L + 2 * pad - kernel_size) // stride + 1

    if use_res and (-(-L // stride)) != L1:
        raise ValueError("use_res with even kernel_size gives a shortcut/left "
                         "length mismatch (the PyTorch module fails here too)")

    # ---- padded sizes / tile shapes ---------------------------------------
    Cout_pad = _round_up(Cout, 128)
    Cin_pad = _round_up(Cin, 128)
    Kp1 = _round_up(kernel_size * Cin, 128)
    tl = min(512, _round_up(L1, 16))
    tl = max(tl, _round_up(kernel_size, 16))     # two tiles cover any tap window
    nblk = _round_up(L1, tl) // tl
    Lp = nblk * tl
    tn = Cout_pad if Cout_pad <= 512 else (256 if Cout_pad % 256 == 0 else 128)
    while kernel_size * Cout_pad * tn * 2 > (8 << 20) and tn % 256 == 0:
        tn //= 2                                 # cap the resident W2 tap stack

    x_nlc = jnp.transpose(x, (0, 2, 1)).astype(jnp.float32)       # (N, L, Cin)

    # ---- conv1 (im2col, full-K) + folded BN + tanh -> h1 (bf16, padded) ----
    p1, L1_chk = _im2col_nlc(x_nlc, kernel_size, stride, pad)
    assert L1_chk == L1
    s1, b1 = _bn_fold(params["bn1"])
    w1 = _w_to_2d(params["w1"]) * s1[None, :]            # fold BN scale (f32)
    w1 = jnp.pad(w1.astype(jnp.bfloat16),
                 ((0, Kp1 - kernel_size * Cin), (0, Cout_pad - Cout)))
    b1p = jnp.pad(b1[None, :].astype(jnp.float32),
                  ((0, 0), (0, Cout_pad - Cout)))
    p1 = jnp.pad(p1.astype(jnp.bfloat16),
                 ((0, 0), (0, Lp - L1), (0, Kp1 - kernel_size * Cin)))

    h1 = pl.pallas_call(
        functools.partial(_conv1_kernel, valid_rows=L1, apply_tanh=True),
        out_shape=jax.ShapeDtypeStruct((N, Lp, Cout_pad), jnp.bfloat16),
        grid=(N, nblk, Cout_pad // tn),
        in_specs=[
            pl.BlockSpec((1, tl, Kp1), lambda n, l, j: (n, l, 0)),
            pl.BlockSpec((Kp1, tn), lambda n, l, j: (0, j)),
            pl.BlockSpec((1, tn), lambda n, l, j: (0, j)),
        ],
        out_specs=pl.BlockSpec((1, tl, tn), lambda n, l, j: (n, l, j)),
        compiler_params=pltpu.CompilerParams(
            dimension_semantics=("parallel", "parallel", "parallel"),
            vmem_limit_bytes=_VMEM_LIMIT),
    )(p1, w1, b1p)

    # ---- conv2 via shifted-window taps + shortcut + BN + tanh --------------
    # h1p rows: [0, pad) zeros | h1[:L1] | zeros, total (nblk + 1) * tl rows,
    # so every tap window of output block l lies inside input blocks l, l + 1.
    h1p = jnp.pad(h1, ((0, 0), (pad, tl - pad), (0, 0)))

    s2, b2 = _bn_fold(params["bn2"])
    w2t = jnp.transpose(params["w2"], (2, 1, 0)) * s2[None, None, :]  # (K,Ci,Co)
    w2t = jnp.pad(w2t.astype(jnp.bfloat16),
                  ((0, 0), (0, Cout_pad - Cout), (0, Cout_pad - Cout)))
    bias = b2

    inputs = [h1p, h1p, w2t]
    in_specs = [
        pl.BlockSpec((1, tl, Cout_pad), lambda n, l, j: (n, l, 0)),
        pl.BlockSpec((1, tl, Cout_pad), lambda n, l, j: (n, l + 1, 0)),
        pl.BlockSpec((kernel_size, Cout_pad, tn), lambda n, l, j: (0, 0, j)),
    ]

    if use_res:
        ssc, bsc = _bn_fold(params["bnsc"])
        bias = bias + bsc                                 # merged BN shifts
        wsc = params["wsc"][:, :, 0].T * ssc[None, :]     # (Cin, Cout), scaled
        wsc = jnp.pad(wsc.astype(jnp.bfloat16),
                      ((0, Cin_pad - Cin), (0, Cout_pad - Cout)))
        xs = jnp.pad(x_nlc[:, ::stride, :].astype(jnp.bfloat16),
                     ((0, 0), (0, Lp - L1), (0, Cin_pad - Cin)))

    bp = jnp.pad(bias[None, :].astype(jnp.float32), ((0, 0), (0, Cout_pad - Cout)))
    inputs.append(bp)
    in_specs.append(pl.BlockSpec((1, tn), lambda n, l, j: (0, j)))
    if use_res:
        inputs += [xs, wsc]
        in_specs += [
            pl.BlockSpec((1, tl, Cin_pad), lambda n, l, j: (n, l, 0)),
            pl.BlockSpec((Cin_pad, tn), lambda n, l, j: (0, j)),
        ]

    out = pl.pallas_call(
        functools.partial(_conv2_tap_kernel, ksize=kernel_size,
                          use_shortcut=use_res, apply_tanh=True),
        out_shape=jax.ShapeDtypeStruct((N, Lp, Cout_pad), jnp.float32),
        grid=(N, nblk, Cout_pad // tn),
        in_specs=in_specs,
        out_specs=pl.BlockSpec((1, tl, tn), lambda n, l, j: (n, l, j)),
        compiler_params=pltpu.CompilerParams(
            dimension_semantics=("parallel", "parallel", "parallel"),
            vmem_limit_bytes=_VMEM_LIMIT),
    )(*inputs)

    # Dropout: identity in eval mode.  Final slice to true extents + NCW.
    # TODO(synk): skip the NCW transpose / emit bf16 if the consumer allows it.
    return out[:, :L1, :Cout].transpose(0, 2, 1)


# ---------------------------------------------------------------------------
# Pure-JAX (f32) reference for verification
# ---------------------------------------------------------------------------
def reference_forward(x, params, kernel_size, stride, use_res):
    dn = ("NCH", "OIH", "NCH")
    pad = int(floor(kernel_size / 2))

    def conv(h, w, s, p):
        return jax.lax.conv_general_dilated(h, w, (s,), [(p, p)],
                                            dimension_numbers=dn)

    def bn(h, bnp):
        scale, shift = _bn_fold(bnp)
        return h * scale[None, :, None] + shift[None, :, None]

    h = jnp.tanh(bn(conv(x, params["w1"], stride, pad), params["bn1"]))
    h = bn(conv(h, params["w2"], 1, pad), params["bn2"])
    if use_res:
        h = h + bn(conv(x, params["wsc"], stride, 0), params["bnsc"])
    return jnp.tanh(h)


# ---------------------------------------------------------------------------
# Deterministic parameter construction + smoke test
# ---------------------------------------------------------------------------
def make_params(key, inchannel, outchannel, kernel_size):
    ks = jax.random.split(key, 9)

    def bn_params(kg, kb):
        return {
            "gamma": 1.0 + 0.1 * jax.random.normal(kg, (outchannel,), jnp.float32),
            "beta": 0.1 * jax.random.normal(kb, (outchannel,), jnp.float32),
            "mean": jnp.zeros((outchannel,), jnp.float32),
            "var": jnp.ones((outchannel,), jnp.float32),
        }

    return {
        "w1": 0.3 * jax.random.normal(ks[0], (outchannel, inchannel, kernel_size), jnp.float32),
        "w2": 0.3 * jax.random.normal(ks[1], (outchannel, outchannel, kernel_size), jnp.float32),
        "wsc": 0.3 * jax.random.normal(ks[2], (outchannel, inchannel, 1), jnp.float32),
        "bn1": bn_params(ks[3], ks[4]),
        "bn2": bn_params(ks[5], ks[6]),
        "bnsc": bn_params(ks[7], ks[8]),
    }


if __name__ == "__main__":
    # Small shapes consistent with the module: x is (batch, inchannel, seq_len).
    N, Cin, Cout, L = 2, 4, 8, 16
    kernel_size, stride, use_res = 3, 2, True

    key = jax.random.PRNGKey(0)
    kx, kp = jax.random.split(key)
    x = jax.random.normal(kx, (N, Cin, L), jnp.float32)
    params = make_params(kp, Cin, Cout, kernel_size)

    fwd = jax.jit(functools.partial(residual_block_forward,
                                    kernel_size=kernel_size,
                                    stride=stride, use_res=use_res))
    out = jax.block_until_ready(fwd(x, params))

    ref = reference_forward(x, params, kernel_size, stride, use_res)
    assert out.shape == ref.shape, (out.shape, ref.shape)
    # bf16 MXU inputs (f32 accumulation / epilogue) => loosened tolerance.
    assert jnp.allclose(out, ref, rtol=3e-2, atol=3e-2), (
        float(jnp.max(jnp.abs(out - ref))))

    print("KERNEL_OK")
</pallas_src>

<mosaic_0001>
module attributes {stable_mosaic.version = 11 : i64} {
  func.func @_conv2_tap_kernel(%arg0: i32, %arg1: i32, %arg2: i32, %arg3: memref<1x16x128xbf16, #tpu.memory_space<vmem>>, %arg4: memref<1x16x128xbf16, #tpu.memory_space<vmem>>, %arg5: memref<3x128x128xbf16, #tpu.memory_space<vmem>>, %arg6: memref<1x128xf32, #tpu.memory_space<vmem>>, %arg7: memref<1x16x128xbf16, #tpu.memory_space<vmem>>, %arg8: memref<128x128xbf16, #tpu.memory_space<vmem>>, %arg9: memref<1x16x128xf32, #tpu.memory_space<vmem>>) attributes {dimension_semantics = [#tpu.dimension_semantics<parallel>, #tpu.dimension_semantics<parallel>, #tpu.dimension_semantics<parallel>], iteration_bounds = array<i64: 2, 1, 1>, scalar_prefetch = 0 : i64, scratch_operands = 0 : i64, tpu.core_type = #tpu.core_type<tc>, window_params = [{transform_indices = @transform_0, window_bounds = array<i64: 1, 16, 128>}, {transform_indices = @transform_1, window_bounds = array<i64: 1, 16, 128>}, {transform_indices = @transform_2, window_bounds = array<i64: 3, 128, 128>}, {transform_indices = @transform_3, window_bounds = array<i64: 1, 128>}, {transform_indices = @transform_4, window_bounds = array<i64: 1, 16, 128>}, {transform_indices = @transform_5, window_bounds = array<i64: 128, 128>}, {transform_indices = @transform_6, window_bounds = array<i64: 1, 16, 128>}]} {
    %c0 = arith.constant 0 : index
    %c0_0 = arith.constant 0 : index
    %c0_1 = arith.constant 0 : index
    %0 = vector.load %arg3[%c0, %c0_0, %c0_1] : memref<1x16x128xbf16, #tpu.memory_space<vmem>>, vector<1x16x128xbf16>
    %1 = vector.shape_cast %0 : vector<1x16x128xbf16> to vector<16x128xbf16>
    %c0_2 = arith.constant 0 : index
    %c0_3 = arith.constant 0 : index
    %c0_4 = arith.constant 0 : index
    %2 = vector.load %arg4[%c0_2, %c0_3, %c0_4] : memref<1x16x128xbf16, #tpu.memory_space<vmem>>, vector<1x16x128xbf16>
    %3 = vector.shape_cast %2 : vector<1x16x128xbf16> to vector<16x128xbf16>
    %4 = tpu.concatenate %1, %3 in 0 : vector<16x128xbf16>, vector<16x128xbf16> -> vector<32x128xbf16>
    %5 = arith.extf %4 : vector<32x128xbf16> to vector<32x128xf32>
    %cst = arith.constant 0.000000e+00 : f32
    %6 = vector.broadcast %cst : f32 to vector<16x128xf32>
    %7 = vector.extract_strided_slice %5 {offsets = [0, 0], sizes = [16, 128], strides = [1, 1]} : vector<32x128xf32> to vector<16x128xf32>
    %8 = arith.truncf %7 : vector<16x128xf32> to vector<16x128xbf16>
    %c0_5 = arith.constant 0 : index
    %c0_6 = arith.constant 0 : index
    %c0_7 = arith.constant 0 : index
    %9 = vector.load %arg5[%c0_5, %c0_6, %c0_7] : memref<3x128x128xbf16, #tpu.memory_space<vmem>>, vector<1x128x128xbf16>
    %10 = vector.shape_cast %9 : vector<1x128x128xbf16> to vector<128x128xbf16>
    %cst_8 = arith.constant dense<0.000000e+00> : vector<16x128xf32>
    %11 = tpu.matmul %8, %10, %cst_8 {dimension_numbers = #tpu.dot_dimension_numbers<[1], [0], [0], [1], [0, 0, 1, 1], [], []>} : vector<16x128xbf16>, vector<128x128xbf16>, vector<16x128xf32> -> vector<16x128xf32>
    %12 = arith.addf %6, %11 : vector<16x128xf32>
    %13 = vector.extract_strided_slice %5 {offsets = [1, 0], sizes = [16, 128], strides = [1, 1]} : vector<32x128xf32> to vector<16x128xf32>
    %14 = arith.truncf %13 : vector<16x128xf32> to vector<16x128xbf16>
    %c1 = arith.constant 1 : index
    %c0_9 = arith.constant 0 : index
    %c0_10 = arith.constant 0 : index
    %15 = vector.load %arg5[%c1, %c0_9, %c0_10] : memref<3x128x128xbf16, #tpu.memory_space<vmem>>, vector<1x128x128xbf16>
    %16 = vector.shape_cast %15 : vector<1x128x128xbf16> to vector<128x128xbf16>
    %cst_11 = arith.constant dense<0.000000e+00> : vector<16x128xf32>
    %17 = tpu.matmul %14, %16, %cst_11 {dimension_numbers = #tpu.dot_dimension_numbers<[1], [0], [0], [1], [0, 0, 1, 1], [], []>} : vector<16x128xbf16>, vector<128x128xbf16>, vector<16x128xf32> -> vector<16x128xf32>
    %18 = arith.addf %12, %17 : vector<16x128xf32>
    %19 = vector.extract_strided_slice %5 {offsets = [2, 0], sizes = [16, 128], strides = [1, 1]} : vector<32x128xf32> to vector<16x128xf32>
    %20 = arith.truncf %19 : vector<16x128xf32> to vector<16x128xbf16>
    %c2 = arith.constant 2 : index
    %c0_12 = arith.constant 0 : index
    %c0_13 = arith.constant 0 : index
    %21 = vector.load %arg5[%c2, %c0_12, %c0_13] : memref<3x128x128xbf16, #tpu.memory_space<vmem>>, vector<1x128x128xbf16>
    %22 = vector.shape_cast %21 : vector<1x128x128xbf16> to vector<128x128xbf16>
    %cst_14 = arith.constant dense<0.000000e+00> : vector<16x128xf32>
    %23 = tpu.matmul %20, %22, %cst_14 {dimension_numbers = #tpu.dot_dimension_numbers<[1], [0], [0], [1], [0, 0, 1, 1], [], []>} : vector<16x128xbf16>, vector<128x128xbf16>, vector<16x128xf32> -> vector<16x128xf32>
    %24 = arith.addf %18, %23 : vector<16x128xf32>
    %c0_15 = arith.constant 0 : index
    %c0_16 = arith.constant 0 : index
    %c0_17 = arith.constant 0 : index
    %25 = vector.load %arg7[%c0_15, %c0_16, %c0_17] : memref<1x16x128xbf16, #tpu.memory_space<vmem>>, vector<1x16x128xbf16>
    %26 = vector.shape_cast %25 : vector<1x16x128xbf16> to vector<16x128xbf16>
    %c0_18 = arith.constant 0 : index
    %c0_19 = arith.constant 0 : index
    %27 = vector.load %arg8[%c0_18, %c0_19] : memref<128x128xbf16, #tpu.memory_space<vmem>>, vector<128x128xbf16>
    %cst_20 = arith.constant dense<0.000000e+00> : vector<16x128xf32>
    %28 = tpu.matmul %26, %27, %cst_20 {dimension_numbers = #tpu.dot_dimension_numbers<[1], [0], [0], [1], [0, 0, 1, 1], [], []>} : vector<16x128xbf16>, vector<128x128xbf16>, vector<16x128xf32> -> vector<16x128xf32>
    %29 = arith.addf %24, %28 : vector<16x128xf32>
    %c0_21 = arith.constant 0 : index
    %c0_22 = arith.constant 0 : index
    %30 = vector.load %arg6[%c0_21, %c0_22] : memref<1x128xf32, #tpu.memory_space<vmem>>, vector<1x128xf32>
    %31 = vector.broadcast %30 : vector<1x128xf32> to vector<16x128xf32>
    %32 = arith.addf %29, %31 : vector<16x128xf32>
    %33 = math.tanh %32 : vector<16x128xf32>
    %c0_23 = arith.constant 0 : index
    %c0_24 = arith.constant 0 : index
    %c0_25 = arith.constant 0 : index
    %34 = vector.load %arg9[%c0_23, %c0_24, %c0_25] : memref<1x16x128xf32, #tpu.memory_space<vmem>>, vector<1x16x128xf32>
    %35 = vector.shape_cast %34 : vector<1x16x128xf32> to vector<16x128xf32>
    %36 = vector.shape_cast %33 : vector<16x128xf32> to vector<1x16x128xf32>
    tpu.vector_store %arg9[%c0_23, %c0_24, %c0_25], %36 {strides = array<i32>} : memref<1x16x128xf32, #tpu.memory_space<vmem>>, vector<1x16x128xf32>,
    return
  }
  func.func @transform_0(%arg0: i32, %arg1: i32, %arg2: i32) -> (i32, i32, i32) {
    %c0_i32 = arith.constant 0 : i32
    %c0_i32_0 = arith.constant 0 : i32
    return %arg0, %arg1, %c0_i32 : i32, i32, i32
  }
  func.func @transform_1(%arg0: i32, %arg1: i32, %arg2: i32) -> (i32, i32, i32) {
    %c1_i32 = arith.constant 1 : i32
    %0 = arith.addi %arg1, %c1_i32 : i32
    %c0_i32 = arith.constant 0 : i32
    %c0_i32_0 = arith.constant 0 : i32
    return %arg0, %0, %c0_i32 : i32, i32, i32
  }
  func.func @transform_2(%arg0: i32, %arg1: i32, %arg2: i32) -> (i32, i32, i32) {
    %c0_i32 = arith.constant 0 : i32
    %c0_i32_0 = arith.constant 0 : i32
    %c0_i32_1 = arith.constant 0 : i32
    return %c0_i32, %c0_i32_0, %arg2 : i32, i32, i32
  }
  func.func @transform_3(%arg0: i32, %arg1: i32, %arg2: i32) -> (i32, i32) {
    %c0_i32 = arith.constant 0 : i32
    %c0_i32_0 = arith.constant 0 : i32
    return %c0_i32, %arg2 : i32, i32
  }
  func.func @transform_4(%arg0: i32, %arg1: i32, %arg2: i32) -> (i32, i32, i32) {
    %c0_i32 = arith.constant 0 : i32
    %c0_i32_0 = arith.constant 0 : i32
    return %arg0, %arg1, %c0_i32 : i32, i32, i32
  }
  func.func @transform_5(%arg0: i32, %arg1: i32, %arg2: i32) -> (i32, i32) {
    %c0_i32 = arith.constant 0 : i32
    %c0_i32_0 = arith.constant 0 : i32
    return %c0_i32, %arg2 : i32, i32
  }
  func.func @transform_6(%arg0: i32, %arg1: i32, %arg2: i32) -> (i32, i32, i32) {
    %c0_i32 = arith.constant 0 : i32
    return %arg0, %arg1, %arg2 : i32, i32, i32
  }
}

module attributes {stable_mosaic.version = 11 : i64} {
  func.func @_conv1_kernel(%arg0: i32, %arg1: i32, %arg2: i32, %arg3: memref<1x16x128xbf16, #tpu.memory_space<vmem>>, %arg4: memref<128x128xbf16, #tpu.memory_space<vmem>>, %arg5: memref<1x128xf32, #tpu.memory_space<vmem>>, %arg6: memref<1x16x128xbf16, #tpu.memory_space<vmem>>) attributes {dimension_semantics = [#tpu.dimension_semantics<parallel>, #tpu.dimension_semantics<parallel>, #tpu.dimension_semantics<parallel>], iteration_bounds = array<i64: 2, 1, 1>, scalar_prefetch = 0 : i64, scratch_operands = 0 : i64, tpu.core_type = #tpu.core_type<tc>, window_params = [{transform_indices = @transform_0, window_bounds = array<i64: 1, 16, 128>}, {transform_indices = @transform_1, window_bounds = array<i64: 128, 128>}, {transform_indices = @transform_2, window_bounds = array<i64: 1, 128>}, {transform_indices = @transform_3, window_bounds = array<i64: 1, 16, 128>}]} {
    %c0 = arith.constant 0 : index
    %c0_0 = arith.constant 0 : index
    %c0_1 = arith.constant 0 : index
    %0 = vector.load %arg3[%c0, %c0_0, %c0_1] : memref<1x16x128xbf16, #tpu.memory_space<vmem>>, vector<1x16x128xbf16>
    %1 = vector.shape_cast %0 : vector<1x16x128xbf16> to vector<16x128xbf16>
    %c0_2 = arith.constant 0 : index
    %c0_3 = arith.constant 0 : index
    %2 = vector.load %arg4[%c0_2, %c0_3] : memref<128x128xbf16, #tpu.memory_space<vmem>>, vector<128x128xbf16>
    %cst = arith.constant dense<0.000000e+00> : vector<16x128xf32>
    %3 = tpu.matmul %1, %2, %cst {dimension_numbers = #tpu.dot_dimension_numbers<[1], [0], [0], [1], [0, 0, 1, 1], [], []>} : vector<16x128xbf16>, vector<128x128xbf16>, vector<16x128xf32> -> vector<16x128xf32>
    %c0_4 = arith.constant 0 : index
    %c0_5 = arith.constant 0 : index
    %4 = vector.load %arg5[%c0_4, %c0_5] : memref<1x128xf32, #tpu.memory_space<vmem>>, vector<1x128xf32>
    %5 = vector.broadcast %4 : vector<1x128xf32> to vector<16x128xf32>
    %6 = arith.addf %3, %5 : vector<16x128xf32>
    %7 = math.tanh %6 : vector<16x128xf32>
    %c16_i32 = arith.constant 16 : i32
    %8 = arith.muli %arg1, %c16_i32 : i32
    %9 = tpu.iota {dimensions = array<i32: 0>} : vector<16x1xi32>
    %10 = vector.broadcast %8 : i32 to vector<16x1xi32>
    %11 = arith.addi %10, %9 : vector<16x1xi32>
    %c8_i32 = arith.constant 8 : i32
    %12 = vector.broadcast %c8_i32 : i32 to vector<16x1xi32>
    %13 = arith.cmpi slt, %11, %12 : vector<16x1xi32>
    %cst_6 = arith.constant 0.000000e+00 : f32
    %14 = vector.shape_cast %13 : vector<16x1xi1> to vector<16x1xi1>
    %15 = vector.broadcast %14 : vector<16x1xi1> to vector<16x128xi1>
    %16 = vector.broadcast %cst_6 : f32 to vector<16x128xf32>
    %17 = arith.select %15, %7, %16 : vector<16x128xi1>, vector<16x128xf32>
    %18 = arith.truncf %17 : vector<16x128xf32> to vector<16x128xbf16>
    %c0_7 = arith.constant 0 : index
    %c0_8 = arith.constant 0 : index
    %c0_9 = arith.constant 0 : index
    %19 = vector.load %arg6[%c0_7, %c0_8, %c0_9] : memref<1x16x128xbf16, #tpu.memory_space<vmem>>, vector<1x16x128xbf16>
    %20 = vector.shape_cast %19 : vector<1x16x128xbf16> to vector<16x128xbf16>
    %21 = vector.shape_cast %18 : vector<16x128xbf16> to vector<1x16x128xbf16>
    tpu.vector_store %arg6[%c0_7, %c0_8, %c0_9], %21 {strides = array<i32>} : memref<1x16x128xbf16, #tpu.memory_space<vmem>>, vector<1x16x128xbf16>,
    return
  }
  func.func @transform_0(%arg0: i32, %arg1: i32, %arg2: i32) -> (i32, i32, i32) {
    %c0_i32 = arith.constant 0 : i32
    %c0_i32_0 = arith.constant 0 : i32
    return %arg0, %arg1, %c0_i32 : i32, i32, i32
  }
  func.func @transform_1(%arg0: i32, %arg1: i32, %arg2: i32) -> (i32, i32) {
    %c0_i32 = arith.constant 0 : i32
    %c0_i32_0 = arith.constant 0 : i32
    return %c0_i32, %arg2 : i32, i32
  }
  func.func @transform_2(%arg0: i32, %arg1: i32, %arg2: i32) -> (i32, i32) {
    %c0_i32 = arith.constant 0 : i32
    %c0_i32_0 = arith.constant 0 : i32
    return %c0_i32, %arg2 : i32, i32
  }
  func.func @transform_3(%arg0: i32, %arg1: i32, %arg2: i32) -> (i32, i32, i32) {
    %c0_i32 = arith.constant 0 : i32
    return %arg0, %arg1, %arg2 : i32, i32, i32
  }
}

</mosaic_0001>

<llo_original>
// kernel: residual_block_forward.2
$region0: #{residual_block_forward.2}
  #allocation0 [shape = 'u32[]', space=smem, size = 0x4, offset = 0x4, fixed_abs, tag = 'smem constant byte address 0x4 - core index']
  #allocation1 [shape = 'u32[144,128]{1,0:T(1,128)}', space=vmem, size = 0x12000, scoped, tag = 'internal scratch']
  %s0 = inlined_call_operand.vmem [shape: bf16[2,16,128], index: 0, kind: input, shape index: {}]
  %s1 = inlined_call_operand.vmem [shape: bf16[128,128], index: 1, kind: input, shape index: {}]
  %s2 = inlined_call_operand.vmem [shape: f32[1,128], index: 2, kind: input, shape index: {}]
  %s3 = inlined_call_operand.vmem [shape: bf16[2,16,128], index: 3, kind: output, shape index: {}]
  %s4 = sld [smem:[#allocation0]]
  $region45: #{residual_block_forward.2} parent=0
    _
  %s6 = ssub.s32 1, %s4
  %s7 = scalar_select 0, %s6, %s4
  loop: start=0, step=1, limit=4
  $region2: #{residual_block_forward.2} parent=0 // loop_pre_header
    _
  $region3: #{residual_block_forward.2} parent=0 // loop_header
    %s9 = sphi 0, %s13
    %p10 = scmp.ge.s32.totalorder %s9, 4
    %s16 = sphi 0, %s35
    %s17 = sphi 0, %s31
    %s18 = sphi 0, %s27
    %s19 = sphi 0, %s16
    %s20 = sphi 0, %s17
    %s21 = sphi 0, %s18
    %s22 = sphi 0, %s19
    %s23 = sphi 0, %s20
    %s24 = sphi 0, %s21
    %s40 = sphi 0, %s42
    %s43 = sphi 0, %s40
    %s44 = sphi 0, %s43
    %s60 = sphi 0, %s44
    %s66 = sphi 0, %s68
    %s69 = sphi 0, %s66
    %s70 = sphi 0, %s69
    %s86 = sphi 0, %s70
    %s92 = sphi 0, %s94
    %s95 = sphi 0, %s92
    %s96 = sphi 0, %s95
    %s112 = sphi 0, %s96
    %s122 = sphi 0, %s124
    %s125 = sphi 0, %s122
    %s126 = sphi 0, %s125
    %s142 = sphi 0, %s126
  $region4: #{residual_block_forward.2} parent=0 // loop_header_branch
    %12 = sbr.rel (%p10) target = $region8
  $region5: #{residual_block_forward.2} parent=0 // loop_body
    %s14 = ssub.s32 %s9, 1
    %s15 = ssub.s32 %s9, 2
    %s25 = sadd.s32 1, %s18
    %p26 = scmp.ge.s32.totalorder %s25, 1
    %s27 = scalar_select %p26, 0, %s25
    %s28 = sadd.s32 1, %s17
    %s29 = scalar_select %p26, %s28, %s17
    %p30 = scmp.ge.s32.totalorder %s29, 1
    %s31 = scalar_select %p30, 0, %s29
    %s32 = sadd.s32 1, %s16
    %s33 = scalar_select %p30, %s32, %s16
    %p34 = scmp.ge.s32.totalorder %s33, 2
    %s35 = scalar_select %p34, 0, %s33
    %s36 = ssub.s32 %s16, %s35
    %s37 = ssub.s32 %s17, %s31
    %s38 = sor.u32 %s36, %s37
    %p39 = scmp.eq.s32.totalorder %s38, 0
    %s41 = sadd.s32 %s40, 1
    %s42 = scalar_select %p39, %s40, %s41
    %p45 = pneg %p39
    %p46 = scmp.eq.s32.totalorder %s9, 1
    %p47 = por %p45, %p46
    %p48 = scmp.ne.s32.totalorder %s40, %s43
    %p49 = scmp.eq.s32.totalorder %s9, 0
    %p50 = por %p48, %p49
    %p51 = scmp.ne.s32.totalorder %s40, %s43
    %p52 = scmp.eq.s32.totalorder %s14, 1
    %p53 = por %p51, %p52
    %p54 = scmp.ne.s32.totalorder %s43, %s44
    %p55 = scmp.eq.s32.totalorder %s14, 0
    %p56 = por %p54, %p55
    %p57 = scmp.ne.s32.totalorder %s43, %s44
    %p58 = scmp.eq.s32.totalorder %s15, 1
    %p59 = por %p57, %p58
    %p61 = scmp.ne.s32.totalorder %s44, %s60
    %p62 = scmp.eq.s32.totalorder %s15, 0
    %p63 = por %p61, %p62
    %s64 = ssub.s32 %s18, %s27
    %p65 = scmp.eq.s32.totalorder %s64, 0
    %s67 = sadd.s32 %s66, 1
    %s68 = scalar_select %p65, %s66, %s67
    %p71 = pneg %p65
    %p72 = scmp.eq.s32.totalorder %s9, 1
    %p73 = por %p71, %p72
    %p74 = scmp.ne.s32.totalorder %s66, %s69
    %p75 = scmp.eq.s32.totalorder %s9, 0
    %p76 = por %p74, %p75
    %p77 = scmp.ne.s32.totalorder %s66, %s69
    %p78 = scmp.eq.s32.totalorder %s14, 1
    %p79 = por %p77, %p78
    %p80 = scmp.ne.s32.totalorder %s69, %s70
    %p81 = scmp.eq.s32.totalorder %s14, 0
    %p82 = por %p80, %p81
    %p83 = scmp.ne.s32.totalorder %s69, %s70
    %p84 = scmp.eq.s32.totalorder %s15, 1
    %p85 = por %p83, %p84
    %p87 = scmp.ne.s32.totalorder %s70, %s86
    %p88 = scmp.eq.s32.totalorder %s15, 0
    %p89 = por %p87, %p88
    %s90 = ssub.s32 %s18, %s27
    %p91 = scmp.eq.s32.totalorder %s90, 0
    %s93 = sadd.s32 %s92, 1
    %s94 = scalar_select %p91, %s92, %s93
    %p97 = pneg %p91
    %p98 = scmp.eq.s32.totalorder %s9, 1
    %p99 = por %p97, %p98
    %p100 = scmp.ne.s32.totalorder %s92, %s95
    %p101 = scmp.eq.s32.totalorder %s9, 0
    %p102 = por %p100, %p101
    %p103 = scmp.ne.s32.totalorder %s92, %s95
    %p104 = scmp.eq.s32.totalorder %s14, 1
    %p105 = por %p103, %p104
    %p106 = scmp.ne.s32.totalorder %s95, %s96
    %p107 = scmp.eq.s32.totalorder %s14, 0
    %p108 = por %p106, %p107
    %p109 = scmp.ne.s32.totalorder %s95, %s96
    %p110 = scmp.eq.s32.totalorder %s15, 1
    %p111 = por %p109, %p110
    %p113 = scmp.ne.s32.totalorder %s96, %s112
    %p114 = scmp.eq.s32.totalorder %s15, 0
    %p115 = por %p113, %p114
    %s116 = ssub.s32 %s16, %s35
    %s117 = ssub.s32 %s17, %s31
    %s118 = sor.u32 %s116, %s117
    %s119 = ssub.s32 %s18, %s27
    %s120 = sor.u32 %s118, %s119
    %p121 = scmp.eq.s32.totalorder %s120, 0
    %s123 = sadd.s32 %s122, 1
    %s124 = scalar_select %p121, %s122, %s123
    %p127 = pneg %p121
    %p128 = scmp.eq.s32.totalorder %s9, 1
    %p129 = por %p127, %p128
    %p130 = scmp.ne.s32.totalorder %s122, %s125
    %p131 = scmp.eq.s32.totalorder %s9, 0
    %p132 = por %p130, %p131
    %p133 = scmp.ne.s32.totalorder %s122, %s125
    %p134 = scmp.eq.s32.totalorder %s14, 1
    %p135 = por %p133, %p134
    %p136 = scmp.ne.s32.totalorder %s125, %s126
    %p137 = scmp.eq.s32.totalorder %s14, 0
    %p138 = por %p136, %p137
    %p139 = scmp.ne.s32.totalorder %s125, %s126
    %p140 = scmp.eq.s32.totalorder %s15, 1
    %p141 = por %p139, %p140
    %p143 = scmp.ne.s32.totalorder %s126, %s142
    %p144 = scmp.eq.s32.totalorder %s15, 0
    %p145 = por %p143, %p144
    %p146 = scmp.le.s32.totalorder 1, %s9
    %p147 = scmp.lt.s32.totalorder %s9, 3
    %p148 = pnand %p146, %p147
    %p149 = pneg %p148
    // Predicated region
    $region9: #{residual_block_forward.2} parent=5 // pred_check
      _
    $region10: #{residual_block_forward.2} parent=5 // pred_check_branch
      %151 = sbr.rel (%p148) target = $region12
    $region11: #{residual_block_forward.2} parent=5 // pred_region
      %s152 = ssub.s32 %s9, 1
      // Predicated region
      $region13: #{residual_block_forward.2} parent=11 // pred_check
        %p153 = pneg %p82
      $region14: #{residual_block_forward.2} parent=11 // pred_check_branch
        %155 = sbr.rel (%p153) target = $region16
      $region15: #{residual_block_forward.2} parent=11 // pred_region
        %p156 = scmp.lt.s32.totalorder %s21, 0
        %s157 = scalar_select %p156, %s21, 0
        %s158 = smul.addr %s157, 4
        %s159 = scalar_lea.vmem %s1, %s158
      $region16: #{residual_block_forward.2} parent=11 // pred_fallthru
        _
      // Predicated region
      $region17: #{residual_block_forward.2} parent=11 // pred_check
        %p160 = pneg %p108
      $region18: #{residual_block_forward.2} parent=11 // pred_check_branch
        %162 = sbr.rel (%p160) target = $region20
      $region19: #{residual_block_forward.2} parent=11 // pred_region
        %p163 = scmp.lt.s32.totalorder %s21, 0
        %s164 = scalar_select %p163, %s21, 0
        %s165 = scalar_lea.vmem %s2, %s164
      $region20: #{residual_block_forward.2} parent=11 // pred_fallthru
        _
    $region12: #{residual_block_forward.2} parent=5 // pred_fallthru
      _
    %p166 = scmp.lt.s32.totalorder %s9, 2
    // Predicated region
    $region21: #{residual_block_forward.2} parent=5 // pred_check
      %p167 = pneg %p166
    $region22: #{residual_block_forward.2} parent=5 // pred_check_branch
      %169 = sbr.rel (%p167) target = $region24
    $region23: #{residual_block_forward.2} parent=5 // pred_region
      // Predicated region
      $region25: #{residual_block_forward.2} parent=23 // pred_check
        %p170 = pneg %p50
      $region26: #{residual_block_forward.2} parent=23 // pred_check_branch
        %172 = sbr.rel (%p170) target = $region28
      $region27: #{residual_block_forward.2} parent=23 // pred_region
        %s173 = smul.u32 2, %s17
        %p174 = scmp.lt.s32.totalorder %s16, 1
        %s175 = scalar_select %p174, %s16, 1
        %p176 = scmp.lt.s32.totalorder %s173, 1
        %s177 = scalar_select %p176, %s173, 1
        %s178 = smul.addr %s175, 2
        %s179 = sadd.s32 %s177, %s178
        %s180 = smul.addr %s179, 4
        %s181 = scalar_lea.vmem %s0, %s180
        %s182 = smul.u32 2, %s17
      $region28: #{residual_block_forward.2} parent=23 // pred_fallthru
        _
    $region24: #{residual_block_forward.2} parent=5 // pred_fallthru
      _
    %p183 = scmp.le.s32.totalorder 1, %s9
    %p184 = scmp.lt.s32.totalorder %s9, 3
    %p185 = pnand %p183, %p184
    %p186 = pneg %p185
    // Predicated region
    $region29: #{residual_block_forward.2} parent=5 // pred_check
      _
    $region30: #{residual_block_forward.2} parent=5 // pred_check_branch
      %188 = sbr.rel (%p185) target = $region32
    $region31: #{residual_block_forward.2} parent=5 // pred_region
      %s189 = ssub.s32 %s9, 1
      %s190 = smul.u32 2, %s20
      %p191 = scmp.lt.s32.totalorder %s19, 1
      %s192 = scalar_select %p191, %s19, 1
      %p193 = scmp.lt.s32.totalorder %s190, 1
      %s194 = scalar_select %p193, %s190, 1
      %s195 = smul.addr %s192, 2
      %s196 = sadd.s32 %s194, %s195
      %s197 = smul.addr %s196, 4
      %s198 = scalar_lea.vmem %s0, %s197
      %p199 = pneg %p56
      %p200 = pneg %p53
      %p201 = scmp.lt.s32.totalorder %s21, 0
      %s202 = scalar_select %p201, %s21, 0
      %s203 = smul.addr %s202, 4
      %s204 = scalar_lea.vmem %s1, %s203
      %p205 = pneg %p82
      %p206 = pneg %p79
      %p207 = scmp.lt.s32.totalorder %s21, 0
      %s208 = scalar_select %p207, %s21, 0
      %s209 = scalar_lea.vmem %s2, %s208
      %p210 = pneg %p108
      %p211 = pneg %p105
      %p212 = pneg %p138
      %p213 = pneg %p135
      %s214 = smul.u32 2, %s20
      %p215 = scmp.lt.s32.totalorder %s19, 1
      %s216 = scalar_select %p215, %s19, 1
      %p217 = scmp.lt.s32.totalorder %s214, 1
      %s218 = scalar_select %p217, %s214, 1
      %p219 = scmp.lt.s32.totalorder %s21, 0
      %s220 = scalar_select %p219, %s21, 0
      %s221 = sadd.s32 %s220, %s218
      %s222 = smul.addr %s216, 2
      %s223 = sadd.s32 %s221, %s222
      %s224 = smul.addr %s223, 4
      %s225 = scalar_lea.vmem %s3, %s224
      %s226 = smul.u32 2, %s20
      %p227 = scmp.lt.s32.totalorder %s19, 1
      %s228 = scalar_select %p227, %s19, 1
      %p229 = scmp.lt.s32.totalorder %s226, 1
      %s230 = scalar_select %p229, %s226, 1
      %s231 = smul.addr %s228, 2
      %s232 = sadd.s32 %s230, %s231
      %s233 = smul.addr %s232, 4
      %s234 = scalar_lea.vmem %s0, %s233
      %s235 = smul.u32 2, %s20
      %p236 = scmp.lt.s32.totalorder %s21, 0
      %s237 = scalar_select %p236, %s21, 0
      %s238 = smul.addr %s237, 4
      %s239 = scalar_lea.vmem %s1, %s238
      %p240 = scmp.lt.s32.totalorder %s21, 0
      %s241 = scalar_select %p240, %s21, 0
      %s242 = scalar_lea.vmem %s2, %s241
      %s243 = smul.u32 2, %s20
      %p244 = scmp.lt.s32.totalorder %s19, 1
      %s245 = scalar_select %p244, %s19, 1
      %p246 = scmp.lt.s32.totalorder %s243, 1
      %s247 = scalar_select %p246, %s243, 1
      %p248 = scmp.lt.s32.totalorder %s21, 0
      %s249 = scalar_select %p248, %s21, 0
      %s250 = sadd.s32 %s249, %s247
      %s251 = smul.addr %s245, 2
      %s252 = sadd.s32 %s250, %s251
      %s253 = smul.addr %s252, 4
      %s254 = scalar_lea.vmem %s3, %s253
      %s255 = smul.u32 2, %s20
      %v257 = vld [vmem:[%s234] sm:$0xf]
      %v258 = vld [vmem:[%s234 + $0x4] sm:$0xf]
      %v259 = vld [vmem:[%s239] sm:$0xf]
      %v260 = vld [vmem:[%s239 + $0x4] sm:$0xf]
      %v261 = vld [vmem:[%s239 + $0x8] sm:$0xf]
      %v262 = vld [vmem:[%s239 + $0xc] sm:$0xf]
      %v263 = vld [vmem:[%s239 + $0x10] sm:$0xf]
      %v264 = vld [vmem:[%s239 + $0x14] sm:$0xf]
      %v265 = vld [vmem:[%s239 + $0x18] sm:$0xf]
      %v266 = vld [vmem:[%s239 + $0x1c] sm:$0xf]
      %v267 = vld [vmem:[%s239 + $0x20] sm:$0xf]
      %v268 = vld [vmem:[%s239 + $0x24] sm:$0xf]
      %v269 = vld [vmem:[%s239 + $0x28] sm:$0xf]
      %v270 = vld [vmem:[%s239 + $0x2c] sm:$0xf]
      %v271 = vld [vmem:[%s239 + $0x30] sm:$0xf]
      %v272 = vld [vmem:[%s239 + $0x34] sm:$0xf]
      %v273 = vld [vmem:[%s239 + $0x38] sm:$0xf]
      %v274 = vld [vmem:[%s239 + $0x3c] sm:$0xf]
      %v275 = vld [vmem:[%s242] sm:$0x1]
      %v277 = vlaneseq
      %v278 = vshrl.u32 %v277, 7
      %v279 = vsub.s32 0, %v278
      %v280 = vrot.slane %v275, %v279
      %v284 = vunpack.c.l.b16 %v257
      %v285 = vunpack.c.l.b16 %v258
      %v286 = vpack.c.b16 %v285, %v284
      %v304 = vunpack.c.l.b16 %v259
      %v305 = vunpack.c.l.b16 %v260
      %v306 = vunpack.c.l.b16 %v261
      %v307 = vunpack.c.l.b16 %v262
      %v308 = vunpack.c.l.b16 %v263
      %v309 = vunpack.c.l.b16 %v264
      %v310 = vunpack.c.l.b16 %v265
      %v311 = vunpack.c.l.b16 %v266
      %v312 = vunpack.c.l.b16 %v267
      %v313 = vunpack.c.l.b16 %v268
      %v314 = vunpack.c.l.b16 %v269
      %v315 = vunpack.c.l.b16 %v270
      %v316 = vunpack.c.l.b16 %v271
      %v317 = vunpack.c.l.b16 %v272
      %v318 = vunpack.c.l.b16 %v273
      %v319 = vunpack.c.l.b16 %v274
      %v320 = vpack.c.b16 %v305, %v304
      %v321 = vpack.c.b16 %v307, %v306
      %v322 = vpack.c.b16 %v309, %v308
      %v323 = vpack.c.b16 %v311, %v310
      %v324 = vpack.c.b16 %v313, %v312
      %v325 = vpack.c.b16 %v315, %v314
      %v326 = vpack.c.b16 %v317, %v316
      %v327 = vpack.c.b16 %v319, %v318
      %336 = vmatprep.subr.bf16.mxu0 0
      %337 = vmatpush1.bf16.msra.mxu0 %v320
      %338 = vmatprep.subr.bf16.mxu0 0
      %339 = vmatpush1.bf16.msra.mxu0 %v321
      %340 = vmatprep.subr.bf16.mxu0 0
      %341 = vmatpush1.bf16.msra.mxu0 %v322
      %342 = vmatprep.subr.bf16.mxu0 0
      %343 = vmatpush1.bf16.msra.mxu0 %v323
      %344 = vmatprep.subr.bf16.mxu0 0
      %345 = vmatpush1.bf16.msra.mxu0 %v324
      %346 = vmatprep.subr.bf16.mxu0 0
      %347 = vmatpush1.bf16.msra.mxu0 %v325
      %348 = vmatprep.subr.bf16.mxu0 0
      %349 = vmatpush1.bf16.msra.mxu0 %v326
      %350 = vmatprep.subr.bf16.mxu0 0
      %351 = vmatpush1.bf16.msra.mxu0 %v327
      %352 = vmatprep.subr.bf16.mxu0 0
      %353 = vmatpush1.bf16.msra.mxu0 0
      %354 = vmatprep.subr.bf16.mxu0 0
      %355 = vmatpush1.bf16.msra.mxu0 0
      %356 = vmatprep.subr.bf16.mxu0 0
      %357 = vmatpush1.bf16.msra.mxu0 0
      %358 = vmatprep.subr.bf16.mxu0 0
      %359 = vmatpush1.bf16.msra.mxu0 0
      %360 = vmatprep.subr.bf16.mxu0 0
      %361 = vmatpush1.bf16.msra.mxu0 0
      %362 = vmatprep.subr.bf16.mxu0 0
      %363 = vmatpush1.bf16.msra.mxu0 0
      %364 = vmatprep.subr.bf16.mxu0 0
      %365 = vmatpush1.bf16.msra.mxu0 0
      %366 = vmatprep.subr.bf16.mxu0 0
      %367 = vmatpush1.bf16.msra.mxu0 0
      %368 = vmatprep.mubr.bf16.mxu0 0
      %369 = vmatmul.mubr.bf16.gmra.mrb[0].mxu0 %v286
      %v370 = vpop.f32.mrb[0].mxu0
      %v371 = vadd.f32 %v280, %v370
      %v372 = vpop.f32.mrb[0].mxu0
      %v373 = vpop.f32.mrb[0].mxu0
      %v374 = vadd.f32 %v280, %v373
      %v375 = vpop.f32.mrb[0].mxu0
      %376 = vdwg.mxu0
      %v377 = vtanh.pop %v371
      %v378 = vtanh.pop %v374
      %s379 = smul.u32 %s20, 16
      %v380 = vlaneseq
      %v381 = vshrl.u32 %v380, 7
      %v382 = vadd.s32 %v381, 8
      %v383 = vstv %s379
      %v384 = vadd.s32 %v383, %v381
      %v385 = vadd.s32 %v383, %v382
      %vm386 = vcmp.lt.s32.totalorder %v384, 8
      %vm387 = vcmp.lt.s32.totalorder %v385, 8
      %v388 = vsel %vm386, 1, 0
      %v389 = vsel %vm387, 1, 0
      %vm390 = vcmp.eq.s32.totalorder %v388, 1
      %vm391 = vcmp.eq.s32.totalorder %v389, 1
      %v392 = vsel %vm390, %v377, 0.0
      %v393 = vsel %vm391, %v378, 0.0
      %v394 = vpack.c.bf16 %v393, %v392
      %v396 = vunpack.c.l.b16 %v394
      %v397 = vunpack.c.h.b16 %v394
      %v398 = vpack.c.b16 %v396, %v396
      %v399 = vpack.c.b16 %v397, %v397
      %402 = vst [vmem:[%s254] sm:$0xf] %v398
      %403 = vst [vmem:[%s254 + $0x4] sm:$0xf] %v399
      %s404 = smul.u32 2, %s20
      %p405 = scmp.lt.s32.totalorder %s19, 1
      %s406 = scalar_select %p405, %s19, 1
      %p407 = scmp.lt.s32.totalorder %s404, 1
      %s408 = scalar_select %p407, %s404, 1
      %p409 = scmp.lt.s32.totalorder %s21, 0
      %s410 = scalar_select %p409, %s21, 0
      %s411 = sadd.s32 %s410, %s408
      %s412 = smul.addr %s406, 2
      %s413 = sadd.s32 %s411, %s412
      %s414 = smul.addr %s413, 4
      %s415 = scalar_lea.vmem %s3, %s414
      // Predicated region
      $region33: #{residual_block_forward.2} parent=31 // pred_check
        %p416 = pneg %p135
      $region34: #{residual_block_forward.2} parent=31 // pred_check_branch
        %418 = sbr.rel (%p416) target = $region36
      $region35: #{residual_block_forward.2} parent=31 // pred_region
        %s419 = smul.u32 2, %s20
      $region36: #{residual_block_forward.2} parent=31 // pred_fallthru
        _
    $region32: #{residual_block_forward.2} parent=5 // pred_fallthru
      _
    %p420 = scmp.le.s32.totalorder 2, %s9
    // Predicated region
    $region37: #{residual_block_forward.2} parent=5 // pred_check
      %p421 = pneg %p420
    $region38: #{residual_block_forward.2} parent=5 // pred_check_branch
      %423 = sbr.rel (%p421) target = $region40
    $region39: #{residual_block_forward.2} parent=5 // pred_region
      %s424 = ssub.s32 %s9, 2
      // Predicated region
      $region41: #{residual_block_forward.2} parent=39 // pred_check
        %p425 = pneg %p141
      $region42: #{residual_block_forward.2} parent=39 // pred_check_branch
        %427 = sbr.rel (%p425) target = $region44
      $region43: #{residual_block_forward.2} parent=39 // pred_region
        %s428 = smul.u32 2, %s23
        %p429 = scmp.lt.s32.totalorder %s22, 1
        %s430 = scalar_select %p429, %s22, 1
        %p431 = scmp.lt.s32.totalorder %s428, 1
        %s432 = scalar_select %p431, %s428, 1
        %p433 = scmp.lt.s32.totalorder %s24, 0
        %s434 = scalar_select %p433, %s24, 0
        %s435 = sadd.s32 %s434, %s432
        %s436 = smul.addr %s430, 2
        %s437 = sadd.s32 %s435, %s436
        %s438 = smul.addr %s437, 4
        %s439 = scalar_lea.vmem %s3, %s438
      $region44: #{residual_block_forward.2} parent=39 // pred_fallthru
        _
    $region40: #{residual_block_forward.2} parent=5 // pred_fallthru
      _
  $region6: #{residual_block_forward.2} parent=0 // loop_footer
    %s13 = sadd.s32 1, %s9
  $region7: #{residual_block_forward.2} parent=0 // loop_footer_branch
    %8 = sbr.rel target = $region3
  $region8: #{residual_block_forward.2} parent=0 // loop_exit
    _

// kernel: residual_block_forward.3
$region0: #{residual_block_forward.3}
  #allocation0 [shape = 'u32[]', space=smem, size = 0x4, offset = 0x4, fixed_abs, tag = 'smem constant byte address 0x4 - core index']
  #allocation1 [shape = 'u32[144,128]{1,0:T(1,128)}', space=vmem, size = 0x12000, scoped, tag = 'internal scratch']
  %s0 = inlined_call_operand.vmem [shape: bf16[2,32,128], index: 0, kind: input, shape index: {}, may-alias: {0,1}]
  %s1 = inlined_call_operand.vmem [shape: bf16[2,32,128], index: 1, kind: input, shape index: {}, may-alias: {0,1}]
  %s2 = inlined_call_operand.vmem [shape: bf16[3,128,128], index: 2, kind: input, shape index: {}]
  %s3 = inlined_call_operand.vmem [shape: f32[1,128], index: 3, kind: input, shape index: {}]
  %s4 = inlined_call_operand.vmem [shape: bf16[2,16,128], index: 4, kind: input, shape index: {}]
  %s5 = inlined_call_operand.vmem [shape: bf16[128,128], index: 5, kind: input, shape index: {}]
  %s6 = inlined_call_operand.vmem [shape: f32[2,16,128], index: 6, kind: output, shape index: {}]
  %s7 = sld [smem:[#allocation0]]
  $region57: #{residual_block_forward.3} parent=0
    _
  %s9 = ssub.s32 1, %s7
  %s10 = scalar_select 0, %s9, %s7
  loop: start=0, step=1, limit=4
  $region2: #{residual_block_forward.3} parent=0 // loop_pre_header
    _
  $region3: #{residual_block_forward.3} parent=0 // loop_header
    %s12 = sphi 0, %s16
    %p13 = scmp.ge.s32.totalorder %s12, 4
    %s19 = sphi 0, %s38
    %s20 = sphi 0, %s34
    %s21 = sphi 0, %s30
    %s22 = sphi 0, %s19
    %s23 = sphi 0, %s20
    %s24 = sphi 0, %s21
    %s25 = sphi 0, %s22
    %s26 = sphi 0, %s23
    %s27 = sphi 0, %s24
    %s43 = sphi 0, %s45
    %s46 = sphi 0, %s43
    %s47 = sphi 0, %s46
    %s63 = sphi 0, %s47
    %s73 = sphi 0, %s75
    %s76 = sphi 0, %s73
    %s77 = sphi 0, %s76
    %s93 = sphi 0, %s77
    %s99 = sphi 0, %s101
    %s102 = sphi 0, %s99
    %s103 = sphi 0, %s102
    %s119 = sphi 0, %s103
    %s125 = sphi 0, %s127
    %s128 = sphi 0, %s125
    %s129 = sphi 0, %s128
    %s145 = sphi 0, %s129
    %s153 = sphi 0, %s155
    %s156 = sphi 0, %s153
    %s157 = sphi 0, %s156
    %s173 = sphi 0, %s157
    %s179 = sphi 0, %s181
    %s182 = sphi 0, %s179
    %s183 = sphi 0, %s182
    %s199 = sphi 0, %s183
    %s209 = sphi 0, %s211
    %s212 = sphi 0, %s209
    %s213 = sphi 0, %s212
    %s229 = sphi 0, %s213
  $region4: #{residual_block_forward.3} parent=0 // loop_header_branch
    %15 = sbr.rel (%p13) target = $region8
  $region5: #{residual_block_forward.3} parent=0 // loop_body
    %s17 = ssub.s32 %s12, 1
    %s18 = ssub.s32 %s12, 2
    %s28 = sadd.s32 1, %s21
    %p29 = scmp.ge.s32.totalorder %s28, 1
    %s30 = scalar_select %p29, 0, %s28
    %s31 = sadd.s32 1, %s20
    %s32 = scalar_select %p29, %s31, %s20
    %p33 = scmp.ge.s32.totalorder %s32, 1
    %s34 = scalar_select %p33, 0, %s32
    %s35 = sadd.s32 1, %s19
    %s36 = scalar_select %p33, %s35, %s19
    %p37 = scmp.ge.s32.totalorder %s36, 2
    %s38 = scalar_select %p37, 0, %s36
    %s39 = ssub.s32 %s19, %s38
    %s40 = ssub.s32 %s20, %s34
    %s41 = sor.u32 %s39, %s40
    %p42 = scmp.eq.s32.totalorder %s41, 0
    %s44 = sadd.s32 %s43, 1
    %s45 = scalar_select %p42, %s43, %s44
    %p48 = pneg %p42
    %p49 = scmp.eq.s32.totalorder %s12, 1
    %p50 = por %p48, %p49
    %p51 = scmp.ne.s32.totalorder %s43, %s46
    %p52 = scmp.eq.s32.totalorder %s12, 0
    %p53 = por %p51, %p52
    %p54 = scmp.ne.s32.totalorder %s43, %s46
    %p55 = scmp.eq.s32.totalorder %s17, 1
    %p56 = por %p54, %p55
    %p57 = scmp.ne.s32.totalorder %s46, %s47
    %p58 = scmp.eq.s32.totalorder %s17, 0
    %p59 = por %p57, %p58
    %p60 = scmp.ne.s32.totalorder %s46, %s47
    %p61 = scmp.eq.s32.totalorder %s18, 1
    %p62 = por %p60, %p61
    %p64 = scmp.ne.s32.totalorder %s47, %s63
    %p65 = scmp.eq.s32.totalorder %s18, 0
    %p66 = por %p64, %p65
    %s67 = sadd.s32 %s20, 1
    %s68 = sadd.s32 %s34, 1
    %s69 = ssub.s32 %s19, %s38
    %s70 = ssub.s32 %s67, %s68
    %s71 = sor.u32 %s69, %s70
    %p72 = scmp.eq.s32.totalorder %s71, 0
    %s74 = sadd.s32 %s73, 1
    %s75 = scalar_select %p72, %s73, %s74
    %p78 = pneg %p72
    %p79 = scmp.eq.s32.totalorder %s12, 1
    %p80 = por %p78, %p79
    %p81 = scmp.ne.s32.totalorder %s73, %s76
    %p82 = scmp.eq.s32.totalorder %s12, 0
    %p83 = por %p81, %p82
    %p84 = scmp.ne.s32.totalorder %s73, %s76
    %p85 = scmp.eq.s32.totalorder %s17, 1
    %p86 = por %p84, %p85
    %p87 = scmp.ne.s32.totalorder %s76, %s77
    %p88 = scmp.eq.s32.totalorder %s17, 0
    %p89 = por %p87, %p88
    %p90 = scmp.ne.s32.totalorder %s76, %s77
    %p91 = scmp.eq.s32.totalorder %s18, 1
    %p92 = por %p90, %p91
    %p94 = scmp.ne.s32.totalorder %s77, %s93
    %p95 = scmp.eq.s32.totalorder %s18, 0
    %p96 = por %p94, %p95
    %s97 = ssub.s32 %s21, %s30
    %p98 = scmp.eq.s32.totalorder %s97, 0
    %s100 = sadd.s32 %s99, 1
    %s101 = scalar_select %p98, %s99, %s100
    %p104 = pneg %p98
    %p105 = scmp.eq.s32.totalorder %s12, 1
    %p106 = por %p104, %p105
    %p107 = scmp.ne.s32.totalorder %s99, %s102
    %p108 = scmp.eq.s32.totalorder %s12, 0
    %p109 = por %p107, %p108
    %p110 = scmp.ne.s32.totalorder %s99, %s102
    %p111 = scmp.eq.s32.totalorder %s17, 1
    %p112 = por %p110, %p111
    %p113 = scmp.ne.s32.totalorder %s102, %s103
    %p114 = scmp.eq.s32.totalorder %s17, 0
    %p115 = por %p113, %p114
    %p116 = scmp.ne.s32.totalorder %s102, %s103
    %p117 = scmp.eq.s32.totalorder %s18, 1
    %p118 = por %p116, %p117
    %p120 = scmp.ne.s32.totalorder %s103, %s119
    %p121 = scmp.eq.s32.totalorder %s18, 0
    %p122 = por %p120, %p121
    %s123 = ssub.s32 %s21, %s30
    %p124 = scmp.eq.s32.totalorder %s123, 0
    %s126 = sadd.s32 %s125, 1
    %s127 = scalar_select %p124, %s125, %s126
    %p130 = pneg %p124
    %p131 = scmp.eq.s32.totalorder %s12, 1
    %p132 = por %p130, %p131
    %p133 = scmp.ne.s32.totalorder %s125, %s128
    %p134 = scmp.eq.s32.totalorder %s12, 0
    %p135 = por %p133, %p134
    %p136 = scmp.ne.s32.totalorder %s125, %s128
    %p137 = scmp.eq.s32.totalorder %s17, 1
    %p138 = por %p136, %p137
    %p139 = scmp.ne.s32.totalorder %s128, %s129
    %p140 = scmp.eq.s32.totalorder %s17, 0
    %p141 = por %p139, %p140
    %p142 = scmp.ne.s32.totalorder %s128, %s129
    %p143 = scmp.eq.s32.totalorder %s18, 1
    %p144 = por %p142, %p143
    %p146 = scmp.ne.s32.totalorder %s129, %s145
    %p147 = scmp.eq.s32.totalorder %s18, 0
    %p148 = por %p146, %p147
    %s149 = ssub.s32 %s19, %s38
    %s150 = ssub.s32 %s20, %s34
    %s151 = sor.u32 %s149, %s150
    %p152 = scmp.eq.s32.totalorder %s151, 0
    %s154 = sadd.s32 %s153, 1
    %s155 = scalar_select %p152, %s153, %s154
    %p158 = pneg %p152
    %p159 = scmp.eq.s32.totalorder %s12, 1
    %p160 = por %p158, %p159
    %p161 = scmp.ne.s32.totalorder %s153, %s156
    %p162 = scmp.eq.s32.totalorder %s12, 0
    %p163 = por %p161, %p162
    %p164 = scmp.ne.s32.totalorder %s153, %s156
    %p165 = scmp.eq.s32.totalorder %s17, 1
    %p166 = por %p164, %p165
    %p167 = scmp.ne.s32.totalorder %s156, %s157
    %p168 = scmp.eq.s32.totalorder %s17, 0
    %p169 = por %p167, %p168
    %p170 = scmp.ne.s32.totalorder %s156, %s157
    %p171 = scmp.eq.s32.totalorder %s18, 1
    %p172 = por %p170, %p171
    %p174 = scmp.ne.s32.totalorder %s157, %s173
    %p175 = scmp.eq.s32.totalorder %s18, 0
    %p176 = por %p174, %p175
    %s177 = ssub.s32 %s21, %s30
    %p178 = scmp.eq.s32.totalorder %s177, 0
    %s180 = sadd.s32 %s179, 1
    %s181 = scalar_select %p178, %s179, %s180
    %p184 = pneg %p178
    %p185 = scmp.eq.s32.totalorder %s12, 1
    %p186 = por %p184, %p185
    %p187 = scmp.ne.s32.totalorder %s179, %s182
    %p188 = scmp.eq.s32.totalorder %s12, 0
    %p189 = por %p187, %p188
    %p190 = scmp.ne.s32.totalorder %s179, %s182
    %p191 = scmp.eq.s32.totalorder %s17, 1
    %p192 = por %p190, %p191
    %p193 = scmp.ne.s32.totalorder %s182, %s183
    %p194 = scmp.eq.s32.totalorder %s17, 0
    %p195 = por %p193, %p194
    %p196 = scmp.ne.s32.totalorder %s182, %s183
    %p197 = scmp.eq.s32.totalorder %s18, 1
    %p198 = por %p196, %p197
    %p200 = scmp.ne.s32.totalorder %s183, %s199
    %p201 = scmp.eq.s32.totalorder %s18, 0
    %p202 = por %p200, %p201
    %s203 = ssub.s32 %s19, %s38
    %s204 = ssub.s32 %s20, %s34
    %s205 = sor.u32 %s203, %s204
    %s206 = ssub.s32 %s21, %s30
    %s207 = sor.u32 %s205, %s206
    %p208 = scmp.eq.s32.totalorder %s207, 0
    %s210 = sadd.s32 %s209, 1
    %s211 = scalar_select %p208, %s209, %s210
    %p214 = pneg %p208
    %p215 = scmp.eq.s32.totalorder %s12, 1
    %p216 = por %p214, %p215
    %p217 = scmp.ne.s32.totalorder %s209, %s212
    %p218 = scmp.eq.s32.totalorder %s12, 0
    %p219 = por %p217, %p218
    %p220 = scmp.ne.s32.totalorder %s209, %s212
    %p221 = scmp.eq.s32.totalorder %s17, 1
    %p222 = por %p220, %p221
    %p223 = scmp.ne.s32.totalorder %s212, %s213
    %p224 = scmp.eq.s32.totalorder %s17, 0
    %p225 = por %p223, %p224
    %p226 = scmp.ne.s32.totalorder %s212, %s213
    %p227 = scmp.eq.s32.totalorder %s18, 1
    %p228 = por %p226, %p227
    %p230 = scmp.ne.s32.totalorder %s213, %s229
    %p231 = scmp.eq.s32.totalorder %s18, 0
    %p232 = por %p230, %p231
    %p233 = scmp.le.s32.totalorder 1, %s12
    %p234 = scmp.lt.s32.totalorder %s12, 3
    %p235 = pnand %p233, %p234
    %p236 = pneg %p235
    // Predicated region
    $region9: #{residual_block_forward.3} parent=5 // pred_check
      _
    $region10: #{residual_block_forward.3} parent=5 // pred_check_branch
      %238 = sbr.rel (%p235) target = $region12
    $region11: #{residual_block_forward.3} parent=5 // pred_region
      %s239 = ssub.s32 %s12, 1
      // Predicated region
      $region13: #{residual_block_forward.3} parent=11 // pred_check
        %p240 = pneg %p115
      $region14: #{residual_block_forward.3} parent=11 // pred_check_branch
        %242 = sbr.rel (%p240) target = $region16
      $region15: #{residual_block_forward.3} parent=11 // pred_region
        %p243 = scmp.lt.s32.totalorder %s24, 0
        %s244 = scalar_select %p243, %s24, 0
        %s245 = smul.addr %s244, 4
        %s246 = scalar_lea.vmem %s2, %s245
      $region16: #{residual_block_forward.3} parent=11 // pred_fallthru
        _
      // Predicated region
      $region17: #{residual_block_forward.3} parent=11 // pred_check
        %p247 = pneg %p141
      $region18: #{residual_block_forward.3} parent=11 // pred_check_branch
        %249 = sbr.rel (%p247) target = $region20
      $region19: #{residual_block_forward.3} parent=11 // pred_region
        %p250 = scmp.lt.s32.totalorder %s24, 0
        %s251 = scalar_select %p250, %s24, 0
        %s252 = scalar_lea.vmem %s3, %s251
      $region20: #{residual_block_forward.3} parent=11 // pred_fallthru
        _
      // Predicated region
      $region21: #{residual_block_forward.3} parent=11 // pred_check
        %p253 = pneg %p195
      $region22: #{residual_block_forward.3} parent=11 // pred_check_branch
        %255 = sbr.rel (%p253) target = $region24
      $region23: #{residual_block_forward.3} parent=11 // pred_region
        %p256 = scmp.lt.s32.totalorder %s24, 0
        %s257 = scalar_select %p256, %s24, 0
        %s258 = smul.addr %s257, 4
        %s259 = scalar_lea.vmem %s5, %s258
      $region24: #{residual_block_forward.3} parent=11 // pred_fallthru
        _
    $region12: #{residual_block_forward.3} parent=5 // pred_fallthru
      _
    %p260 = scmp.lt.s32.totalorder %s12, 2
    // Predicated region
    $region25: #{residual_block_forward.3} parent=5 // pred_check
      %p261 = pneg %p260
    $region26: #{residual_block_forward.3} parent=5 // pred_check_branch
      %263 = sbr.rel (%p261) target = $region28
    $region27: #{residual_block_forward.3} parent=5 // pred_region
      // Predicated region
      $region29: #{residual_block_forward.3} parent=27 // pred_check
        %p264 = pneg %p53
      $region30: #{residual_block_forward.3} parent=27 // pred_check_branch
        %266 = sbr.rel (%p264) target = $region32
      $region31: #{residual_block_forward.3} parent=27 // pred_region
        %s267 = smul.u32 2, %s20
        %p268 = scmp.lt.s32.totalorder %s19, 1
        %s269 = scalar_select %p268, %s19, 1
        %p270 = scmp.lt.s32.totalorder %s267, 3
        %s271 = scalar_select %p270, %s267, 3
        %s272 = smul.addr %s269, 4
        %s273 = sadd.s32 %s271, %s272
        %s274 = smul.addr %s273, 4
        %s275 = scalar_lea.vmem %s0, %s274
        %s276 = smul.u32 2, %s20
      $region32: #{residual_block_forward.3} parent=27 // pred_fallthru
        _
      // Predicated region
      $region33: #{residual_block_forward.3} parent=27 // pred_check
        %p277 = pneg %p83
      $region34: #{residual_block_forward.3} parent=27 // pred_check_branch
        %279 = sbr.rel (%p277) target = $region36
      $region35: #{residual_block_forward.3} parent=27 // pred_region
        %s280 = sadd.s32 %s20, 1
        %s281 = smul.u32 2, %s280
        %p282 = scmp.lt.s32.totalorder %s19, 1
        %s283 = scalar_select %p282, %s19, 1
        %p284 = scmp.lt.s32.totalorder %s281, 3
        %s285 = scalar_select %p284, %s281, 3
        %s286 = smul.addr %s283, 4
        %s287 = sadd.s32 %s285, %s286
        %s288 = smul.addr %s287, 4
        %s289 = scalar_lea.vmem %s1, %s288
        %s290 = sadd.s32 %s20, 1
        %s291 = smul.u32 2, %s290
      $region36: #{residual_block_forward.3} parent=27 // pred_fallthru
        _
      // Predicated region
      $region37: #{residual_block_forward.3} parent=27 // pred_check
        %p292 = pneg %p163
      $region38: #{residual_block_forward.3} parent=27 // pred_check_branch
        %294 = sbr.rel (%p292) target = $region40
      $region39: #{residual_block_forward.3} parent=27 // pred_region
        %s295 = smul.u32 2, %s20
        %p296 = scmp.lt.s32.totalorder %s19, 1
        %s297 = scalar_select %p296, %s19, 1
        %p298 = scmp.lt.s32.totalorder %s295, 1
        %s299 = scalar_select %p298, %s295, 1
        %s300 = smul.addr %s297, 2
        %s301 = sadd.s32 %s299, %s300
        %s302 = smul.addr %s301, 4
        %s303 = scalar_lea.vmem %s4, %s302
        %s304 = smul.u32 2, %s20
      $region40: #{residual_block_forward.3} parent=27 // pred_fallthru
        _
    $region28: #{residual_block_forward.3} parent=5 // pred_fallthru
      _
    %p305 = scmp.le.s32.totalorder 1, %s12
    %p306 = scmp.lt.s32.totalorder %s12, 3
    %p307 = pnand %p305, %p306
    %p308 = pneg %p307
    // Predicated region
    $region41: #{residual_block_forward.3} parent=5 // pred_check
      _
    $region42: #{residual_block_forward.3} parent=5 // pred_check_branch
      %310 = sbr.rel (%p307) target = $region44
    $region43: #{residual_block_forward.3} parent=5 // pred_region
      %s311 = ssub.s32 %s12, 1
      %s312 = smul.u32 2, %s23
      %p313 = scmp.lt.s32.totalorder %s22, 1
      %s314 = scalar_select %p313, %s22, 1
      %p315 = scmp.lt.s32.totalorder %s312, 3
      %s316 = scalar_select %p315, %s312, 3
      %s317 = smul.addr %s314, 4
      %s318 = sadd.s32 %s316, %s317
      %s319 = smul.addr %s318, 4
      %s320 = scalar_lea.vmem %s0, %s319
      %p321 = pneg %p59
      %p322 = pneg %p56
      %s323 = sadd.s32 %s23, 1
      %s324 = smul.u32 2, %s323
      %p325 = scmp.lt.s32.totalorder %s22, 1
      %s326 = scalar_select %p325, %s22, 1
      %p327 = scmp.lt.s32.totalorder %s324, 3
      %s328 = scalar_select %p327, %s324, 3
      %s329 = smul.addr %s326, 4
      %s330 = sadd.s32 %s328, %s329
      %s331 = smul.addr %s330, 4
      %s332 = scalar_lea.vmem %s1, %s331
      %p333 = pneg %p89
      %p334 = pneg %p86
      %p335 = scmp.lt.s32.totalorder %s24, 0
      %s336 = scalar_select %p335, %s24, 0
      %s337 = smul.addr %s336, 4
      %s338 = scalar_lea.vmem %s2, %s337
      %p339 = pneg %p115
      %p340 = pneg %p112
      %p341 = scmp.lt.s32.totalorder %s24, 0
      %s342 = scalar_select %p341, %s24, 0
      %s343 = scalar_lea.vmem %s3, %s342
      %p344 = pneg %p141
      %p345 = pneg %p138
      %s346 = smul.u32 2, %s23
      %p347 = scmp.lt.s32.totalorder %s22, 1
      %s348 = scalar_select %p347, %s22, 1
      %p349 = scmp.lt.s32.totalorder %s346, 1
      %s350 = scalar_select %p349, %s346, 1
      %s351 = smul.addr %s348, 2
      %s352 = sadd.s32 %s350, %s351
      %s353 = smul.addr %s352, 4
      %s354 = scalar_lea.vmem %s4, %s353
      %p355 = pneg %p169
      %p356 = pneg %p166
      %p357 = scmp.lt.s32.totalorder %s24, 0
      %s358 = scalar_select %p357, %s24, 0
      %s359 = smul.addr %s358, 4
      %s360 = scalar_lea.vmem %s5, %s359
      %p361 = pneg %p195
      %p362 = pneg %p192
      %p363 = pneg %p225
      %p364 = pneg %p222
      %s365 = smul.u32 2, %s23
      %p366 = scmp.lt.s32.totalorder %s22, 1
      %s367 = scalar_select %p366, %s22, 1
      %p368 = scmp.lt.s32.totalorder %s365, 1
      %s369 = scalar_select %p368, %s365, 1
      %p370 = scmp.lt.s32.totalorder %s24, 0
      %s371 = scalar_select %p370, %s24, 0
      %s372 = sadd.s32 %s371, %s369
      %s373 = smul.addr %s367, 2
      %s374 = sadd.s32 %s372, %s373
      %s375 = smul.addr %s374, 8
      %s376 = scalar_lea.vmem %s6, %s375
      %s377 = smul.u32 2, %s23
      %p378 = scmp.lt.s32.totalorder %s22, 1
      %s379 = scalar_select %p378, %s22, 1
      %p380 = scmp.lt.s32.totalorder %s377, 3
      %s381 = scalar_select %p380, %s377, 3
      %s382 = smul.addr %s379, 4
      %s383 = sadd.s32 %s381, %s382
      %s384 = smul.addr %s383, 4
      %s385 = scalar_lea.vmem %s0, %s384
      %s386 = smul.u32 2, %s23
      %s387 = sadd.s32 %s23, 1
      %s388 = smul.u32 2, %s387
      %p389 = scmp.lt.s32.totalorder %s22, 1
      %s390 = scalar_select %p389, %s22, 1
      %p391 = scmp.lt.s32.totalorder %s388, 3
      %s392 = scalar_select %p391, %s388, 3
      %s393 = smul.addr %s390, 4
      %s394 = sadd.s32 %s392, %s393
      %s395 = smul.addr %s394, 4
      %s396 = scalar_lea.vmem %s1, %s395
      %s397 = sadd.s32 %s23, 1
      %s398 = smul.u32 2, %s397
      %p399 = scmp.lt.s32.totalorder %s24, 0
      %s400 = scalar_select %p399, %s24, 0
      %s401 = smul.addr %s400, 4
      %s402 = scalar_lea.vmem %s2, %s401
      %p403 = scmp.lt.s32.totalorder %s24, 0
      %s404 = scalar_select %p403, %s24, 0
      %s405 = scalar_lea.vmem %s3, %s404
      %s406 = smul.u32 2, %s23
      %p407 = scmp.lt.s32.totalorder %s22, 1
      %s408 = scalar_select %p407, %s22, 1
      %p409 = scmp.lt.s32.totalorder %s406, 1
      %s410 = scalar_select %p409, %s406, 1
      %s411 = smul.addr %s408, 2
      %s412 = sadd.s32 %s410, %s411
      %s413 = smul.addr %s412, 4
      %s414 = scalar_lea.vmem %s4, %s413
      %s415 = smul.u32 2, %s23
      %p416 = scmp.lt.s32.totalorder %s24, 0
      %s417 = scalar_select %p416, %s24, 0
      %s418 = smul.addr %s417, 4
      %s419 = scalar_lea.vmem %s5, %s418
      %s420 = smul.u32 2, %s23
      %p421 = scmp.lt.s32.totalorder %s22, 1
      %s422 = scalar_select %p421, %s22, 1
      %p423 = scmp.lt.s32.totalorder %s420, 1
      %s424 = scalar_select %p423, %s420, 1
      %p425 = scmp.lt.s32.totalorder %s24, 0
      %s426 = scalar_select %p425, %s24, 0
      %s427 = sadd.s32 %s426, %s424
      %s428 = smul.addr %s422, 2
      %s429 = sadd.s32 %s427, %s428
      %s430 = smul.addr %s429, 8
      %s431 = scalar_lea.vmem %s6, %s430
      %s432 = smul.u32 2, %s23
      %v434 = vld [vmem:[%s385] sm:$0xf]
      %v435 = vld [vmem:[%s385 + $0x4] sm:$0xf]
      %v436 = vld [vmem:[%s396] sm:$0xf]
      %v437 = vld [vmem:[%s396 + $0x4] sm:$0xf]
      %v440 = vunpack.c.l.b16 %v434
      %v441 = vunpack.c.l.b16 %v435
      %v442 = vpack.c.b16 %v441, %v440
      %v446 = vunpack.c.l.b16 %v436
      %v447 = vunpack.c.l.b16 %v437
      %v448 = vpack.c.b16 %v447, %v446
      %v450 = vunpack.c.l.bf16 %v442
      %v451 = vunpack.c.h.bf16 %v442
      %v452 = vunpack.c.l.bf16 %v448
      %v453 = vpack.c.bf16 %v451, %v450
      %v454 = vld [vmem:[%s402] sm:$0xf]
      %v455 = vld [vmem:[%s402 + $0x4] sm:$0xf]
      %v456 = vld [vmem:[%s402 + $0x8] sm:$0xf]
      %v457 = vld [vmem:[%s402 + $0xc] sm:$0xf]
      %v458 = vld [vmem:[%s402 + $0x10] sm:$0xf]
      %v459 = vld [vmem:[%s402 + $0x14] sm:$0xf]
      %v460 = vld [vmem:[%s402 + $0x18] sm:$0xf]
      %v461 = vld [vmem:[%s402 + $0x1c] sm:$0xf]
      %v462 = vld [vmem:[%s402 + $0x20] sm:$0xf]
      %v463 = vld [vmem:[%s402 + $0x24] sm:$0xf]
      %v464 = vld [vmem:[%s402 + $0x28] sm:$0xf]
      %v465 = vld [vmem:[%s402 + $0x2c] sm:$0xf]
      %v466 = vld [vmem:[%s402 + $0x30] sm:$0xf]
      %v467 = vld [vmem:[%s402 + $0x34] sm:$0xf]
      %v468 = vld [vmem:[%s402 + $0x38] sm:$0xf]
      %v469 = vld [vmem:[%s402 + $0x3c] sm:$0xf]
      %v470 = vpack.c.bf16 %v452, %v452
      %s471 = scalar_lea.vmem %s402, 64
      %v472 = vld [vmem:[%s471] sm:$0xf]
      %v473 = vld [vmem:[%s471 + $0x4] sm:$0xf]
      %v474 = vld [vmem:[%s471 + $0x8] sm:$0xf]
      %v475 = vld [vmem:[%s471 + $0xc] sm:$0xf]
      %v476 = vld [vmem:[%s471 + $0x10] sm:$0xf]
      %v477 = vld [vmem:[%s471 + $0x14] sm:$0xf]
      %v478 = vld [vmem:[%s471 + $0x18] sm:$0xf]
      %v479 = vld [vmem:[%s471 + $0x1c] sm:$0xf]
      %v480 = vld [vmem:[%s471 + $0x20] sm:$0xf]
      %v481 = vld [vmem:[%s471 + $0x24] sm:$0xf]
      %v482 = vld [vmem:[%s471 + $0x28] sm:$0xf]
      %v483 = vld [vmem:[%s471 + $0x2c] sm:$0xf]
      %v484 = vld [vmem:[%s471 + $0x30] sm:$0xf]
      %v485 = vld [vmem:[%s471 + $0x34] sm:$0xf]
      %v486 = vld [vmem:[%s471 + $0x38] sm:$0xf]
      %v487 = vld [vmem:[%s471 + $0x3c] sm:$0xf]
      %vm488 = vsmask.f32 7424
      %v490 = vshrl.u32 %v453, 16
      %v492 = vshll.u32 %v453, 16
      %v494 = vrot.slane %v492, 1
      %v495 = vor.u32 %v490, %v494
      %v497 = vshll.u32 %v470, 16
      %v499 = vrot.slane %v497, 1
      %v500 = vsel %vm488, %v495, %v499
      %v518 = vunpack.c.l.b16 %v472
      %v519 = vunpack.c.l.b16 %v473
      %v520 = vunpack.c.l.b16 %v474
      %v521 = vunpack.c.l.b16 %v475
      %v522 = vunpack.c.l.b16 %v476
      %v523 = vunpack.c.l.b16 %v477
      %v524 = vunpack.c.l.b16 %v478
      %v525 = vunpack.c.l.b16 %v479
      %v526 = vunpack.c.l.b16 %v480
      %v527 = vunpack.c.l.b16 %v481
      %v528 = vunpack.c.l.b16 %v482
      %v529 = vunpack.c.l.b16 %v483
      %v530 = vunpack.c.l.b16 %v484
      %v531 = vunpack.c.l.b16 %v485
      %v532 = vunpack.c.l.b16 %v486
      %v533 = vunpack.c.l.b16 %v487
      %v534 = vpack.c.b16 %v519, %v518
      %v535 = vpack.c.b16 %v521, %v520
      %v536 = vpack.c.b16 %v523, %v522
      %v537 = vpack.c.b16 %v525, %v524
      %v538 = vpack.c.b16 %v527, %v526
      %v539 = vpack.c.b16 %v529, %v528
      %v540 = vpack.c.b16 %v531, %v530
      %v541 = vpack.c.b16 %v533, %v532
      %550 = vmatprep.subr.bf16.mxu0 0
      %551 = vmatpush1.bf16.msra.mxu0 %v534
      %552 = vmatprep.subr.bf16.mxu0 0
      %553 = vmatpush1.bf16.msra.mxu0 %v535
      %554 = vmatprep.subr.bf16.mxu0 0
      %555 = vmatpush1.bf16.msra.mxu0 %v536
      %556 = vmatprep.subr.bf16.mxu0 0
      %557 = vmatpush1.bf16.msra.mxu0 %v537
      %558 = vmatprep.subr.bf16.mxu0 0
      %559 = vmatpush1.bf16.msra.mxu0 %v538
      %560 = vmatprep.subr.bf16.mxu0 0
      %561 = vmatpush1.bf16.msra.mxu0 %v539
      %562 = vmatprep.subr.bf16.mxu0 0
      %563 = vmatpush1.bf16.msra.mxu0 %v540
      %564 = vmatprep.subr.bf16.mxu0 0
      %565 = vmatpush1.bf16.msra.mxu0 %v541
      %566 = vmatprep.subr.bf16.mxu0 0
      %567 = vmatpush1.bf16.msra.mxu0 0
      %568 = vmatprep.subr.bf16.mxu0 0
      %569 = vmatpush1.bf16.msra.mxu0 0
      %570 = vmatprep.subr.bf16.mxu0 0
      %571 = vmatpush1.bf16.msra.mxu0 0
      %572 = vmatprep.subr.bf16.mxu0 0
      %573 = vmatpush1.bf16.msra.mxu0 0
      %574 = vmatprep.subr.bf16.mxu0 0
      %575 = vmatpush1.bf16.msra.mxu0 0
      %576 = vmatprep.subr.bf16.mxu0 0
      %577 = vmatpush1.bf16.msra.mxu0 0
      %578 = vmatprep.subr.bf16.mxu0 0
      %579 = vmatpush1.bf16.msra.mxu0 0
      %580 = vmatprep.subr.bf16.mxu0 0
      %581 = vmatpush1.bf16.msra.mxu0 0
      %582 = vmatprep.mubr.bf16.mxu0 0
      %583 = vmatmul.mubr.bf16.gmra.mrb[0].mxu0 %v500
      %v584 = vpop.f32.mrb[0].mxu0
      %v585 = vadd.f32 0.0, %v584
      %v586 = vpop.f32.mrb[0].mxu0
      %v587 = vpop.f32.mrb[0].mxu0
      %v588 = vadd.f32 0.0, %v587
      %v589 = vpop.f32.mrb[0].mxu0
      %590 = vdwg.mxu0
      %v607 = vunpack.c.l.b16 %v454
      %v608 = vunpack.c.l.b16 %v455
      %v609 = vunpack.c.l.b16 %v456
      %v610 = vunpack.c.l.b16 %v457
      %v611 = vunpack.c.l.b16 %v458
      %v612 = vunpack.c.l.b16 %v459
      %v613 = vunpack.c.l.b16 %v460
      %v614 = vunpack.c.l.b16 %v461
      %v615 = vunpack.c.l.b16 %v462
      %v616 = vunpack.c.l.b16 %v463
      %v617 = vunpack.c.l.b16 %v464
      %v618 = vunpack.c.l.b16 %v465
      %v619 = vunpack.c.l.b16 %v466
      %v620 = vunpack.c.l.b16 %v467
      %v621 = vunpack.c.l.b16 %v468
      %v622 = vunpack.c.l.b16 %v469
      %v623 = vpack.c.b16 %v608, %v607
      %v624 = vpack.c.b16 %v610, %v609
      %v625 = vpack.c.b16 %v612, %v611
      %v626 = vpack.c.b16 %v614, %v613
      %v627 = vpack.c.b16 %v616, %v615
      %v628 = vpack.c.b16 %v618, %v617
      %v629 = vpack.c.b16 %v620, %v619
      %v630 = vpack.c.b16 %v622, %v621
      %639 = vmatprep.subr.bf16.mxu0 0
      %640 = vmatpush1.bf16.msra.mxu0 %v623
      %641 = vmatprep.subr.bf16.mxu0 0
      %642 = vmatpush1.bf16.msra.mxu0 %v624
      %643 = vmatprep.subr.bf16.mxu0 0
      %644 = vmatpush1.bf16.msra.mxu0 %v625
      %645 = vmatprep.subr.bf16.mxu0 0
      %646 = vmatpush1.bf16.msra.mxu0 %v626
      %647 = vmatprep.subr.bf16.mxu0 0
      %648 = vmatpush1.bf16.msra.mxu0 %v627
      %649 = vmatprep.subr.bf16.mxu0 0
      %650 = vmatpush1.bf16.msra.mxu0 %v628
      %651 = vmatprep.subr.bf16.mxu0 0
      %652 = vmatpush1.bf16.msra.mxu0 %v629
      %653 = vmatprep.subr.bf16.mxu0 0
      %654 = vmatpush1.bf16.msra.mxu0 %v630
      %655 = vmatprep.subr.bf16.mxu0 0
      %656 = vmatpush1.bf16.msra.mxu0 0
      %657 = vmatprep.subr.bf16.mxu0 0
      %658 = vmatpush1.bf16.msra.mxu0 0
      %659 = vmatprep.subr.bf16.mxu0 0
      %660 = vmatpush1.bf16.msra.mxu0 0
      %661 = vmatprep.subr.bf16.mxu0 0
      %662 = vmatpush1.bf16.msra.mxu0 0
      %663 = vmatprep.subr.bf16.mxu0 0
      %664 = vmatpush1.bf16.msra.mxu0 0
      %665 = vmatprep.subr.bf16.mxu0 0
      %666 = vmatpush1.bf16.msra.mxu0 0
      %667 = vmatprep.subr.bf16.mxu0 0
      %668 = vmatpush1.bf16.msra.mxu0 0
      %669 = vmatprep.subr.bf16.mxu0 0
      %670 = vmatpush1.bf16.msra.mxu0 0
      %671 = vmatprep.mubr.bf16.mxu0 0
      %672 = vmatmul.mubr.bf16.gmra.mrb[0].mxu0 %v453
      %v673 = vpop.f32.mrb[0].mxu0
      %v674 = vadd.f32 %v585, %v673
      %v675 = vpop.f32.mrb[0].mxu0
      %v676 = vpop.f32.mrb[0].mxu0
      %v677 = vadd.f32 %v588, %v676
      %v678 = vpop.f32.mrb[0].mxu0
      %679 = vdwg.mxu0
      %s680 = scalar_lea.vmem %s402, 128
      %v681 = vld [vmem:[%s680] sm:$0xf]
      %v682 = vld [vmem:[%s680 + $0x4] sm:$0xf]
      %v683 = vld [vmem:[%s680 + $0x8] sm:$0xf]
      %v684 = vld [vmem:[%s680 + $0xc] sm:$0xf]
      %v685 = vld [vmem:[%s680 + $0x10] sm:$0xf]
      %v686 = vld [vmem:[%s680 + $0x14] sm:$0xf]
      %v687 = vld [vmem:[%s680 + $0x18] sm:$0xf]
      %v688 = vld [vmem:[%s680 + $0x1c] sm:$0xf]
      %v689 = vld [vmem:[%s680 + $0x20] sm:$0xf]
      %v690 = vld [vmem:[%s680 + $0x24] sm:$0xf]
      %v691 = vld [vmem:[%s680 + $0x28] sm:$0xf]
      %v692 = vld [vmem:[%s680 + $0x2c] sm:$0xf]
      %v693 = vld [vmem:[%s680 + $0x30] sm:$0xf]
      %v694 = vld [vmem:[%s680 + $0x34] sm:$0xf]
      %v695 = vld [vmem:[%s680 + $0x38] sm:$0xf]
      %v696 = vld [vmem:[%s680 + $0x3c] sm:$0xf]
      %vm699 = vcmask 1046528
      %v700 = vrot.slane %v453, 1
      %v701 = vrot.slane %v470, 1
      %v702 = vsel %vm699, %v700, %v701
      %v720 = vunpack.c.l.b16 %v681
      %v721 = vunpack.c.l.b16 %v682
      %v722 = vunpack.c.l.b16 %v683
      %v723 = vunpack.c.l.b16 %v684
      %v724 = vunpack.c.l.b16 %v685
      %v725 = vunpack.c.l.b16 %v686
      %v726 = vunpack.c.l.b16 %v687
      %v727 = vunpack.c.l.b16 %v688
      %v728 = vunpack.c.l.b16 %v689
      %v729 = vunpack.c.l.b16 %v690
      %v730 = vunpack.c.l.b16 %v691
      %v731 = vunpack.c.l.b16 %v692
      %v732 = vunpack.c.l.b16 %v693
      %v733 = vunpack.c.l.b16 %v694
      %v734 = vunpack.c.l.b16 %v695
      %v735 = vunpack.c.l.b16 %v696
      %v736 = vpack.c.b16 %v721, %v720
      %v737 = vpack.c.b16 %v723, %v722
      %v738 = vpack.c.b16 %v725, %v724
      %v739 = vpack.c.b16 %v727, %v726
      %v740 = vpack.c.b16 %v729, %v728
      %v741 = vpack.c.b16 %v731, %v730
      %v742 = vpack.c.b16 %v733, %v732
      %v743 = vpack.c.b16 %v735, %v734
      %752 = vmatprep.subr.bf16.mxu0 0
      %753 = vmatpush1.bf16.msra.mxu0 %v736
      %754 = vmatprep.subr.bf16.mxu0 0
      %755 = vmatpush1.bf16.msra.mxu0 %v737
      %756 = vmatprep.subr.bf16.mxu0 0
      %757 = vmatpush1.bf16.msra.mxu0 %v738
      %758 = vmatprep.subr.bf16.mxu0 0
      %759 = vmatpush1.bf16.msra.mxu0 %v739
      %760 = vmatprep.subr.bf16.mxu0 0
      %761 = vmatpush1.bf16.msra.mxu0 %v740
      %762 = vmatprep.subr.bf16.mxu0 0
      %763 = vmatpush1.bf16.msra.mxu0 %v741
      %764 = vmatprep.subr.bf16.mxu0 0
      %765 = vmatpush1.bf16.msra.mxu0 %v742
      %766 = vmatprep.subr.bf16.mxu0 0
      %767 = vmatpush1.bf16.msra.mxu0 %v743
      %768 = vmatprep.subr.bf16.mxu0 0
      %769 = vmatpush1.bf16.msra.mxu0 0
      %770 = vmatprep.subr.bf16.mxu0 0
      %771 = vmatpush1.bf16.msra.mxu0 0
      %772 = vmatprep.subr.bf16.mxu0 0
      %773 = vmatpush1.bf16.msra.mxu0 0
      %774 = vmatprep.subr.bf16.mxu0 0
      %775 = vmatpush1.bf16.msra.mxu0 0
      %776 = vmatprep.subr.bf16.mxu0 0
      %777 = vmatpush1.bf16.msra.mxu0 0
      %778 = vmatprep.subr.bf16.mxu0 0
      %779 = vmatpush1.bf16.msra.mxu0 0
      %780 = vmatprep.subr.bf16.mxu0 0
      %781 = vmatpush1.bf16.msra.mxu0 0
      %782 = vmatprep.subr.bf16.mxu0 0
      %783 = vmatpush1.bf16.msra.mxu0 0
      %784 = vmatprep.mubr.bf16.mxu0 0
      %785 = vmatmul.mubr.bf16.gmra.mrb[0].mxu0 %v702
      %v786 = vpop.f32.mrb[0].mxu0
      %v787 = vadd.f32 0.0, %v786
      %v788 = vpop.f32.mrb[0].mxu0
      %v789 = vpop.f32.mrb[0].mxu0
      %v790 = vadd.f32 0.0, %v789
      %v791 = vpop.f32.mrb[0].mxu0
      %792 = vdwg.mxu0
      %v793 = vadd.f32 %v674, %v787
      %v794 = vadd.f32 %v677, %v790
      %v795 = vld [vmem:[%s414] sm:$0xf]
      %v796 = vld [vmem:[%s414 + $0x4] sm:$0xf]
      %v797 = vld [vmem:[%s419] sm:$0xf]
      %v798 = vld [vmem:[%s419 + $0x4] sm:$0xf]
      %v799 = vld [vmem:[%s419 + $0x8] sm:$0xf]
      %v800 = vld [vmem:[%s419 + $0xc] sm:$0xf]
      %v801 = vld [vmem:[%s419 + $0x10] sm:$0xf]
      %v802 = vld [vmem:[%s419 + $0x14] sm:$0xf]
      %v803 = vld [vmem:[%s419 + $0x18] sm:$0xf]
      %v804 = vld [vmem:[%s419 + $0x1c] sm:$0xf]
      %v805 = vld [vmem:[%s419 + $0x20] sm:$0xf]
      %v806 = vld [vmem:[%s419 + $0x24] sm:$0xf]
      %v807 = vld [vmem:[%s419 + $0x28] sm:$0xf]
      %v808 = vld [vmem:[%s419 + $0x2c] sm:$0xf]
      %v809 = vld [vmem:[%s419 + $0x30] sm:$0xf]
      %v810 = vld [vmem:[%s419 + $0x34] sm:$0xf]
      %v811 = vld [vmem:[%s419 + $0x38] sm:$0xf]
      %v812 = vld [vmem:[%s419 + $0x3c] sm:$0xf]
      %v815 = vunpack.c.l.b16 %v795
      %v816 = vunpack.c.l.b16 %v796
      %v817 = vpack.c.b16 %v816, %v815
      %v835 = vunpack.c.l.b16 %v797
      %v836 = vunpack.c.l.b16 %v798
      %v837 = vunpack.c.l.b16 %v799
      %v838 = vunpack.c.l.b16 %v800
      %v839 = vunpack.c.l.b16 %v801
      %v840 = vunpack.c.l.b16 %v802
      %v841 = vunpack.c.l.b16 %v803
      %v842 = vunpack.c.l.b16 %v804
      %v843 = vunpack.c.l.b16 %v805
      %v844 = vunpack.c.l.b16 %v806
      %v845 = vunpack.c.l.b16 %v807
      %v846 = vunpack.c.l.b16 %v808
      %v847 = vunpack.c.l.b16 %v809
      %v848 = vunpack.c.l.b16 %v810
      %v849 = vunpack.c.l.b16 %v811
      %v850 = vunpack.c.l.b16 %v812
      %v851 = vpack.c.b16 %v836, %v835
      %v852 = vpack.c.b16 %v838, %v837
      %v853 = vpack.c.b16 %v840, %v839
      %v854 = vpack.c.b16 %v842, %v841
      %v855 = vpack.c.b16 %v844, %v843
      %v856 = vpack.c.b16 %v846, %v845
      %v857 = vpack.c.b16 %v848, %v847
      %v858 = vpack.c.b16 %v850, %v849
      %867 = vmatprep.subr.bf16.mxu0 0
      %868 = vmatpush1.bf16.msra.mxu0 %v851
      %869 = vmatprep.subr.bf16.mxu0 0
      %870 = vmatpush1.bf16.msra.mxu0 %v852
      %871 = vmatprep.subr.bf16.mxu0 0
      %872 = vmatpush1.bf16.msra.mxu0 %v853
      %873 = vmatprep.subr.bf16.mxu0 0
      %874 = vmatpush1.bf16.msra.mxu0 %v854
      %875 = vmatprep.subr.bf16.mxu0 0
      %876 = vmatpush1.bf16.msra.mxu0 %v855
      %877 = vmatprep.subr.bf16.mxu0 0
      %878 = vmatpush1.bf16.msra.mxu0 %v856
      %879 = vmatprep.subr.bf16.mxu0 0
      %880 = vmatpush1.bf16.msra.mxu0 %v857
      %881 = vmatprep.subr.bf16.mxu0 0
      %882 = vmatpush1.bf16.msra.mxu0 %v858
      %883 = vmatprep.subr.bf16.mxu0 0
      %884 = vmatpush1.bf16.msra.mxu0 0
      %885 = vmatprep.subr.bf16.mxu0 0
      %886 = vmatpush1.bf16.msra.mxu0 0
      %887 = vmatprep.subr.bf16.mxu0 0
      %888 = vmatpush1.bf16.msra.mxu0 0
      %889 = vmatprep.subr.bf16.mxu0 0
      %890 = vmatpush1.bf16.msra.mxu0 0
      %891 = vmatprep.subr.bf16.mxu0 0
      %892 = vmatpush1.bf16.msra.mxu0 0
      %893 = vmatprep.subr.bf16.mxu0 0
      %894 = vmatpush1.bf16.msra.mxu0 0
      %895 = vmatprep.subr.bf16.mxu0 0
      %896 = vmatpush1.bf16.msra.mxu0 0
      %897 = vmatprep.subr.bf16.mxu0 0
      %898 = vmatpush1.bf16.msra.mxu0 0
      %899 = vmatprep.mubr.bf16.mxu0 0
      %900 = vmatmul.mubr.bf16.gmra.mrb[0].mxu0 %v817
      %v901 = vpop.f32.mrb[0].mxu0
      %v902 = vadd.f32 0.0, %v901
      %v903 = vpop.f32.mrb[0].mxu0
      %v904 = vpop.f32.mrb[0].mxu0
      %v905 = vadd.f32 0.0, %v904
      %v906 = vpop.f32.mrb[0].mxu0
      %907 = vdwg.mxu0
      %v908 = vadd.f32 %v793, %v902
      %v909 = vadd.f32 %v794, %v905
      %v910 = vld [vmem:[%s405] sm:$0x1]
      %v912 = vlaneseq
      %v913 = vshrl.u32 %v912, 7
      %v914 = vsub.s32 0, %v913
      %v915 = vrot.slane %v910, %v914
      %v917 = vadd.f32 %v908, %v915
      %v918 = vadd.f32 %v909, %v915
      %v919 = vtanh.pop %v917
      %v920 = vtanh.pop %v918
      %921 = vst [vmem:[%s431] sm:$0xff] %v919
      %922 = vst [vmem:[%s431 + $0x8] sm:$0xff] %v920
      %s923 = smul.u32 2, %s23
      %p924 = scmp.lt.s32.totalorder %s22, 1
      %s925 = scalar_select %p924, %s22, 1
      %p926 = scmp.lt.s32.totalorder %s923, 1
      %s927 = scalar_select %p926, %s923, 1
      %p928 = scmp.lt.s32.totalorder %s24, 0
      %s929 = scalar_select %p928, %s24, 0
      %s930 = sadd.s32 %s929, %s927
      %s931 = smul.addr %s925, 2
      %s932 = sadd.s32 %s930, %s931
      %s933 = smul.addr %s932, 8
      %s934 = scalar_lea.vmem %s6, %s933
      // Predicated region
      $region45: #{residual_block_forward.3} parent=43 // pred_check
        %p935 = pneg %p222
      $region46: #{residual_block_forward.3} parent=43 // pred_check_branch
        %937 = sbr.rel (%p935) target = $region48
      $region47: #{residual_block_forward.3} parent=43 // pred_region
        %s938 = smul.u32 2, %s23
      $region48: #{residual_block_forward.3} parent=43 // pred_fallthru
        _
    $region44: #{residual_block_forward.3} parent=5 // pred_fallthru
      _
    %p939 = scmp.le.s32.totalorder 2, %s12
    // Predicated region
    $region49: #{residual_block_forward.3} parent=5 // pred_check
      %p940 = pneg %p939
    $region50: #{residual_block_forward.3} parent=5 // pred_check_branch
      %942 = sbr.rel (%p940) target = $region52
    $region51: #{residual_block_forward.3} parent=5 // pred_region
      %s943 = ssub.s32 %s12, 2
      // Predicated region
      $region53: #{residual_block_forward.3} parent=51 // pred_check
        %p944 = pneg %p228
      $region54: #{residual_block_forward.3} parent=51 // pred_check_branch
        %946 = sbr.rel (%p944) target = $region56
      $region55: #{residual_block_forward.3} parent=51 // pred_region
        %s947 = smul.u32 2, %s26
        %p948 = scmp.lt.s32.totalorder %s25, 1
        %s949 = scalar_select %p948, %s25, 1
        %p950 = scmp.lt.s32.totalorder %s947, 1
        %s951 = scalar_select %p950, %s947, 1
        %p952 = scmp.lt.s32.totalorder %s27, 0
        %s953 = scalar_select %p952, %s27, 0
        %s954 = sadd.s32 %s953, %s951
        %s955 = smul.addr %s949, 2
        %s956 = sadd.s32 %s954, %s955
        %s957 = smul.addr %s956, 8
        %s958 = scalar_lea.vmem %s6, %s957
      $region56: #{residual_block_forward.3} parent=51 // pred_fallthru
        _
    $region52: #{residual_block_forward.3} parent=5 // pred_fallthru
      _
  $region6: #{residual_block_forward.3} parent=0 // loop_footer
    %s16 = sadd.s32 1, %s12
  $region7: #{residual_block_forward.3} parent=0 // loop_footer_branch
    %11 = sbr.rel target = $region3
  $region8: #{residual_block_forward.3} parent=0 // loop_exit
    _

</llo_original>
